<compile_context>
chip_gen: v7x
topology: tpu7x:2x2x1
jax: 0.10.0
libtpu: 0.0.40
codegen_flags: <defaults>
</compile_context>

<pallas_src>
import functools
import math

import jax
import jax.numpy as jnp
from jax.experimental import pallas as pl
from jax.experimental.pallas import tpu as pltpu


# ----------------------------------------------------------------------------
# Spherical-harmonic helpers (mirror the PyTorch code; used by the pure-JAX
# reference and to build the per-row coefficients folded into the kernels).
# ----------------------------------------------------------------------------
def legendre_p(l, m, x):
    assert abs(m) <= l, "invalid (l, m)"
    if l == 0:
        return jnp.ones_like(x)
    elif l == 1:
        if m == 1:
            return -jnp.sqrt(1.0 - x * x)
        if m == 0:
            return x
        if m == -1:
            return 0.5 * jnp.sqrt(1.0 - x * x)
    elif l == 2:
        if m == 2:
            return 3.0 * (1.0 - x * x)
        if m == 1:
            return -3.0 * x * jnp.sqrt(1.0 - x * x)
        if m == 0:
            return 0.5 * (3.0 * x * x - 1.0)
        if m == -1:
            return 0.5 * x * jnp.sqrt(1.0 - x * x)
        if m == -2:
            return 0.125 * (1.0 - x * x)
    else:
        if m < 0:
            return ((-1) ** m) * math.factorial(l + m) / math.factorial(l - m) * legendre_p(l, -m, x)
        if l == m:
            return -(2.0 * l - 1.0) * jnp.sqrt(1.0 - x * x) * legendre_p(l - 1, l - 1, x)
        elif l == m + 1:
            return x * (2.0 * l - 1.0) * legendre_p(l - 1, l - 1, x)
        else:
            prefac = 1.0 / float(l - m)
            return prefac * ((2.0 * l - 1.0) * x * legendre_p(l - 1, m, x)
                             - (l - 1.0 + m) * legendre_p(l - 2, m, x))


def sphy_coeff(l, m):
    numerator = (2.0 * l + 1.0) * math.factorial(l - m)
    denominator = 4.0 * math.pi * math.factorial(l + m)
    return ((-1.0) ** m) * math.sqrt(numerator / denominator)


def make_coeffs(lmax):
    coeffs = {(0, 0): 2.0 * math.pi * math.sqrt(4.0 * math.pi) * sphy_coeff(0, 0) ** 2}
    for l in range(1, lmax + 1):
        c = 2.0 * math.pi * math.sqrt(4.0 * math.pi / (2.0 * l + 1.0))
        for m in range(0, l + 1):
            coeffs[(l, m)] = c * sphy_coeff(l, m) ** 2
    return coeffs


# ----------------------------------------------------------------------------
# Tiling / VMEM heuristics
# ----------------------------------------------------------------------------
_LANE = 128
_MAX_POINT_TILE = 32768          # per-step DMA stays well above the ~0.35us/step overhead


def _round_up(x, m):
    return (x + m - 1) // m * m


def _vmem_capacity_bytes():
    try:
        return int(pltpu.get_tpu_info().vmem_capacity_bytes)
    except Exception:
        return 64 * 1024 * 1024  # conservative fallback: v7x has 64 MiB per TensorCore


def _analysis_point_bytes(c_in, k_rows, lmax):
    lanes_cin = _round_up(c_in, _LANE)
    return (3 * 4 * 2                 # theta/phi/areas tiles (f32, double buffered)
            + 4 * lanes_cin * 2       # values tile (f32, lane-padded, double buffered)
            + 2 * lanes_cin           # bf16 cast of the values tile
            + 6 * k_rows              # f32 basis scratch + bf16 copy fed to the MXU
            + 4 * (2 * lmax + 4))     # cos/sin/Legendre temporaries


def _synthesis_point_bytes(c_out, k_rows, lmax):
    lanes_cout = _round_up(c_out, _LANE)
    lanes_k = _round_up(k_rows, _LANE)
    return (2 * 4 * 2                 # theta/phi tiles
            + 4 * lanes_cout * 2      # output tile (f32, lane-padded, double buffered)
            + 4 * lanes_cout          # matmul result before the store
            + 4 * lanes_k             # transposed basis (points in sublanes)
            + 4 * k_rows              # basis scratch
            + 4 * (2 * lmax + 4))


def _choose_tile(n, per_point_bytes, budget_bytes, requested=None):
    """Largest lane-aligned point tile whose working set fits the VMEM budget."""
    if requested is not None:
        tile = int(requested)
        assert tile % _LANE == 0, "point tile must be a multiple of 128"
    else:
        cap = max(_LANE, budget_bytes // per_point_bytes // _LANE * _LANE)
        tile = int(min(_MAX_POINT_TILE, cap, _round_up(n, _LANE)))
    return tile, _round_up(n, tile)


def _vmem_limit_bytes(per_point_bytes, tile, vmem_cap):
    est = per_point_bytes * tile + 2 * 1024 * 1024
    return int(min(max(2 * est, 32 * 1024 * 1024), (vmem_cap * 3) // 4))


# ----------------------------------------------------------------------------
# In-kernel basis generation (same recurrences as the PyTorch LegendreP)
# ----------------------------------------------------------------------------
def _build_basis_rows(basis_ref, theta, phi, lmax, row_scale):
    """Write packed real-SH rows (row (l,m) scaled by row_scale(l, m)) into basis_ref.

    basis_ref: (K, T) f32 VMEM scratch; theta, phi: (1, T) f32.
    """
    ct = jnp.cos(theta)
    st = jnp.sqrt(jnp.maximum(1.0 - ct * ct, 0.0))
    # Associated Legendre P_lm (m >= 0) via the same recurrences as LegendreP.
    p = {(0, 0): jnp.ones_like(ct)}
    for l in range(1, lmax + 1):
        p[(l, l)] = -(2.0 * l - 1.0) * st * p[(l - 1, l - 1)]
        p[(l, l - 1)] = (2.0 * l - 1.0) * ct * p[(l - 1, l - 1)]
        for m in range(l - 2, -1, -1):
            p[(l, m)] = ((2.0 * l - 1.0) * ct * p[(l - 1, m)]
                         - (l - 1.0 + m) * p[(l - 2, m)]) / float(l - m)
    k = 0
    for l in range(lmax + 1):
        basis_ref[k:k + 1, :] = row_scale(l, 0) * p[(l, 0)]
        k += 1
        for m in range(1, l + 1):
            c = row_scale(l, m)
            cm = jnp.cos(m * phi)
            sm = jnp.sin(m * phi)
            legm = p[(l, m)]
            basis_ref[k:k + 1, :] = (c * cm) * legm
            k += 1
            basis_ref[k:k + 1, :] = (-c * sm) * legm
            k += 1


# ----------------------------------------------------------------------------
# Pallas kernels
# ----------------------------------------------------------------------------
def _analysis_kernel(theta_ref, phi_ref, areas_ref, vals_ref, w_ref,
                     coef_ref, basis_ref, s_acc, *, lmax, coeffs, negative_slope):
    # theta/phi/areas : (1, 1, tn) f32 point tiles
    # vals_ref        : (1, tn, Cin) f32
    # w_ref           : (L, Cin, Cout) f32
    # coef_ref        : (1, K, Cout) f32 output (activated spectrum)
    # basis_ref       : (K, tn) f32 scratch (regenerated every step)
    # s_acc           : (K, Cin) f32 running spectrum accumulator
    t = pl.program_id(1)

    @pl.when(t == 0)
    def _init():
        s_acc[...] = jnp.zeros_like(s_acc)

    theta = theta_ref[0]                       # (1, tn)
    phi = phi_ref[0]
    area = areas_ref[0]
    # Analysis coefficient folded into the rows (normalizes magnitudes pre-bf16).
    _build_basis_rows(basis_ref, theta, phi, lmax, lambda l, m: coeffs[(l, m)])

    y = (basis_ref[...] * area).astype(jnp.bfloat16)        # (K, tn), area bcast over rows
    v = vals_ref[0].astype(jnp.bfloat16)                    # (tn, Cin)
    s_acc[...] += jnp.dot(y, v, preferred_element_type=jnp.float32)

    @pl.when(t == pl.num_programs(1) - 1)
    def _finalize():
        k_dim, _ = s_acc.shape
        c_out = w_ref.shape[-1]
        s = s_acc[...]
        kidx = jax.lax.broadcasted_iota(jnp.int32, (k_dim, 1), 0)
        r = jnp.zeros((k_dim, c_out), jnp.float32)
        for l in range(lmax + 1):               # tiny per-degree weight matmuls
            sel = (kidx >= l * l) & (kidx < (l + 1) * (l + 1))
            r = r + jnp.dot(jnp.where(sel, s, 0.0), w_ref[l],
                            preferred_element_type=jnp.float32)
        coef_ref[0] = jnp.where(r >= 0, r, negative_slope * r).astype(coef_ref.dtype)


def _synthesis_kernel(coef_ref, theta_ref, phi_ref, out_ref, basis_ref, *, lmax):
    # coef_ref  : (1, K, Cout) f32 activated spectrum
    # theta/phi : (1, 1, tno) f32 output point tiles
    # out_ref   : (1, tno, Cout) f32 block of the final (B, Nout, Cout) array
    # basis_ref : (K, tno) f32 scratch
    theta = theta_ref[0]
    phi = phi_ref[0]
    # Synthesis uses the same packed rows; the 2x factor for m>0 is folded here.
    _build_basis_rows(basis_ref, theta, phi, lmax,
                      lambda l, m: 1.0 if m == 0 else 2.0)
    y = basis_ref[...]                          # (K, tno) f32
    a = coef_ref[0]                             # (K, Cout) f32
    out_ref[0] = jnp.dot(y.T, a, preferred_element_type=jnp.float32).astype(out_ref.dtype)


# ----------------------------------------------------------------------------
# Wrapper
# ----------------------------------------------------------------------------
def spherical_conv_pallas(theta, phi, areas, values, weights, *, lmax,
                          theta_out=None, phi_out=None, negative_slope=0.01,
                          tile_n=None, tile_n_out=None):
    values = jnp.asarray(values, jnp.float32)
    B, N, c_in = values.shape
    L = lmax + 1
    K = L * L
    weights = jnp.asarray(weights, jnp.float32)
    assert weights.shape[:2] == (L, c_in), weights.shape
    c_out = weights.shape[-1]
    coeffs = make_coeffs(lmax)

    if theta_out is None and phi_out is None:
        theta_o, phi_o = theta, phi
    else:
        theta_o = theta if theta_out is None else theta_out
        phi_o = phi if phi_out is None else phi_out
    n_out = theta_o.shape[-1]

    vmem_cap = _vmem_capacity_bytes()
    tile_budget = vmem_cap // 4

    a_ppb = _analysis_point_bytes(c_in, K, lmax)
    s_ppb = _synthesis_point_bytes(c_out, K, lmax)
    tn, n_pad = _choose_tile(N, a_ppb, tile_budget, tile_n)
    tno, n_out_pad = _choose_tile(n_out, s_ppb, tile_budget, tile_n_out)

    def pad_points(x, n_to):
        pad = n_to - x.shape[1]
        if pad == 0:
            return x
        widths = ((0, 0), (0, pad)) + ((0, 0),) * (x.ndim - 2)
        return jnp.pad(x, widths)

    # Padded points carry area == 0, so they contribute nothing to the analysis
    # sum; padded output points are sliced off at the end.
    theta_p = pad_points(jnp.asarray(theta, jnp.float32), n_pad)[:, None, :]
    phi_p = pad_points(jnp.asarray(phi, jnp.float32), n_pad)[:, None, :]
    areas_p = pad_points(jnp.asarray(areas, jnp.float32), n_pad)[:, None, :]
    values_p = pad_points(values, n_pad)

    theta_op = pad_points(jnp.asarray(theta_o, jnp.float32), n_out_pad)[:, None, :]
    phi_op = pad_points(jnp.asarray(phi_o, jnp.float32), n_out_pad)[:, None, :]

    # ---- pass 1: analysis (reduction over input points) + weights + LeakyReLU ----
    spec = pl.pallas_call(
        functools.partial(_analysis_kernel, lmax=lmax, coeffs=coeffs,
                          negative_slope=negative_slope),
        out_shape=jax.ShapeDtypeStruct((B, K, c_out), jnp.float32),
        grid=(B, n_pad // tn),
        in_specs=[
            pl.BlockSpec((1, 1, tn), lambda b, t: (b, 0, t)),
            pl.BlockSpec((1, 1, tn), lambda b, t: (b, 0, t)),
            pl.BlockSpec((1, 1, tn), lambda b, t: (b, 0, t)),
            pl.BlockSpec((1, tn, c_in), lambda b, t: (b, t, 0)),
            pl.BlockSpec((L, c_in, c_out), lambda b, t: (0, 0, 0)),
        ],
        out_specs=pl.BlockSpec((1, K, c_out), lambda b, t: (b, 0, 0)),
        scratch_shapes=[pltpu.VMEM((K, tn), jnp.float32),
                        pltpu.VMEM((K, c_in), jnp.float32)],
        compiler_params=pltpu.CompilerParams(
            dimension_semantics=("parallel", "arbitrary"),
            vmem_limit_bytes=_vmem_limit_bytes(a_ppb, tn, vmem_cap)),
        cost_estimate=pl.CostEstimate(
            flops=2 * B * n_pad * K * c_in + 2 * B * L * K * c_in * c_out,
            transcendentals=B * n_pad * (2 + 2 * lmax),
            bytes_accessed=B * n_pad * 4 * (3 + c_in) + L * c_in * c_out * 4
                           + B * K * c_out * 4),
    )(theta_p, phi_p, areas_p, values_p, weights)

    # ---- pass 2: synthesis (expansion over output points), output in module layout ----
    out_pad = pl.pallas_call(
        functools.partial(_synthesis_kernel, lmax=lmax),
        out_shape=jax.ShapeDtypeStruct((B, n_out_pad, c_out), jnp.float32),
        grid=(B, n_out_pad // tno),
        in_specs=[
            pl.BlockSpec((1, K, c_out), lambda b, t: (b, 0, 0)),
            pl.BlockSpec((1, 1, tno), lambda b, t: (b, 0, t)),
            pl.BlockSpec((1, 1, tno), lambda b, t: (b, 0, t)),
        ],
        out_specs=pl.BlockSpec((1, tno, c_out), lambda b, t: (b, t, 0)),
        scratch_shapes=[pltpu.VMEM((K, tno), jnp.float32)],
        compiler_params=pltpu.CompilerParams(
            dimension_semantics=("parallel", "parallel"),
            vmem_limit_bytes=_vmem_limit_bytes(s_ppb, tno, vmem_cap)),
        cost_estimate=pl.CostEstimate(
            flops=2 * B * n_out_pad * K * c_out,
            transcendentals=B * n_out_pad * (2 + 2 * lmax),
            bytes_accessed=B * n_out_pad * (8 + 4 * c_out) + B * K * c_out * 4),
    )(spec, theta_op, phi_op)

    return out_pad[:, :n_out, :]


# ----------------------------------------------------------------------------
# Pure-JAX reference that mirrors the PyTorch forward statement-by-statement
# ----------------------------------------------------------------------------
def ref_forward(theta, phi, areas, values, weights, lmax, negative_slope=0.01):
    coeffs = make_coeffs(lmax)
    theta = theta[..., None]
    phi_ = phi[..., None]
    areas_ = areas[..., None]
    hp = jax.lax.Precision.HIGHEST
    exp_in = {m: jnp.cos(m * phi_) - 1j * jnp.sin(m * phi_) for m in range(1, lmax + 1)}
    ct = jnp.cos(theta)
    leg = {(0, 0): legendre_p(0, 0, ct)}
    for l in range(1, lmax + 1):
        for m in range(0, l + 1):
            leg[(l, m)] = legendre_p(l, m, ct)
    results = []
    prod = areas_ * leg[(0, 0)] * jnp.matmul(values, weights[0], precision=hp)
    results.append(coeffs[(0, 0)] * jnp.sum(prod, axis=1, keepdims=True))
    for l in range(1, lmax + 1):
        prod = areas_ * jnp.matmul(values, weights[l], precision=hp)
        results.append(coeffs[(l, 0)] * jnp.sum(leg[(l, 0)] * prod, axis=1, keepdims=True))
        for m in range(1, l + 1):
            tmp = coeffs[(l, m)] * jnp.sum(leg[(l, m)] * prod * exp_in[m], axis=1, keepdims=True)
            results.append(jnp.real(tmp))
            results.append(jnp.imag(tmp))
    results = jnp.concatenate(results, axis=1)                            # (B, K, Cout)
    results = jnp.where(results >= 0, results, negative_slope * results)  # LeakyReLU
    parts = [results[:, i:i + 1, :] for i in range(results.shape[1])]
    result = parts[0] * leg[(0, 0)]
    count = 1
    for l in range(1, lmax + 1):
        result = result + parts[count] * leg[(l, 0)]
        count += 1
        for m in range(1, l + 1):
            tre = parts[count] * jnp.real(exp_in[m]); count += 1
            tim = parts[count] * jnp.imag(exp_in[m]); count += 1
            result = result + leg[(l, m)] * 2.0 * (tre + tim)
    return result


# ----------------------------------------------------------------------------
if __name__ == "__main__":
    lmax = 2
    B, N, c_in, c_out = 2, 500, 8, 32    # N not a multiple of 128 -> exercises padding

    key = jax.random.PRNGKey(0)
    k1, k2, k3, k4, k5 = jax.random.split(key, 5)
    theta = jax.random.uniform(k1, (B, N), jnp.float32, 0.0, math.pi)
    phi = jax.random.uniform(k2, (B, N), jnp.float32, 0.0, 2.0 * math.pi)
    areas = jax.random.uniform(k3, (B, N), jnp.float32, 0.0, 4.0 * math.pi / N)
    values = jax.random.normal(k4, (B, N, c_in), jnp.float32)
    # Deterministic stand-in for the lmax+1 nn.Parameter((n_in, n_out)) weights.
    weights = jax.random.normal(k5, (lmax + 1, c_in, c_out), jnp.float32)

    ref = ref_forward(theta, phi, areas, values, weights, lmax)
    scale = float(jnp.max(jnp.abs(ref)))

    # Small explicit tiles -> exercises the tiled reduction/expansion + padding path.
    out = spherical_conv_pallas(theta, phi, areas, values, weights, lmax=lmax,
                                tile_n=128, tile_n_out=128)
    out = jax.block_until_ready(out)
    assert out.shape == (B, N, c_out), out.shape
    err = float(jnp.max(jnp.abs(out - ref)))
    # bf16 MXU operands with f32 accumulation -> ~1%-level numerics vs f32 reference.
    assert err <= 3e-2 * max(1.0, scale), f"mismatch (tiled): max_err={err} scale={scale}"

    # Auto-sized tiles (VMEM-budget driven) -> exercises the single-step path.
    out2 = spherical_conv_pallas(theta, phi, areas, values, weights, lmax=lmax)
    out2 = jax.block_until_ready(out2)
    err2 = float(jnp.max(jnp.abs(out2 - ref)))
    assert err2 <= 3e-2 * max(1.0, scale), f"mismatch (auto): max_err={err2} scale={scale}"

    print("KERNEL_OK")
</pallas_src>

<mosaic_0001>
module attributes {stable_mosaic.version = 11 : i64} {
  func.func @_analysis_kernel(%arg0: i32, %arg1: i32, %arg2: memref<1x1x128xf32, #tpu.memory_space<vmem>>, %arg3: memref<1x1x128xf32, #tpu.memory_space<vmem>>, %arg4: memref<1x1x128xf32, #tpu.memory_space<vmem>>, %arg5: memref<1x128x8xf32, #tpu.memory_space<vmem>>, %arg6: memref<3x8x32xf32, #tpu.memory_space<vmem>>, %arg7: memref<1x9x32xf32, #tpu.memory_space<vmem>>, %arg8: memref<9x128xf32, #tpu.memory_space<vmem>>, %arg9: memref<9x8xf32, #tpu.memory_space<vmem>>) attributes {dimension_semantics = [#tpu.dimension_semantics<parallel>, #tpu.dimension_semantics<arbitrary>], iteration_bounds = array<i64: 2, 4>, scalar_prefetch = 0 : i64, scratch_operands = 2 : i64, tpu.core_type = #tpu.core_type<tc>, window_params = [{transform_indices = @transform_0, window_bounds = array<i64: 1, 1, 128>}, {transform_indices = @transform_1, window_bounds = array<i64: 1, 1, 128>}, {transform_indices = @transform_2, window_bounds = array<i64: 1, 1, 128>}, {transform_indices = @transform_3, window_bounds = array<i64: 1, 128, 8>}, {pipeline_mode = #tpu.pipeline_mode<synchronous>, transform_indices = @transform_4, window_bounds = array<i64: 3, 8, 32>}, {transform_indices = @transform_5, window_bounds = array<i64: 1, 9, 32>}]} {
    %c0_i32 = arith.constant 0 : i32
    %0 = arith.cmpi eq, %arg1, %c0_i32 : i32
    %1 = arith.extui %0 : i1 to i32
    %c0_i32_0 = arith.constant 0 : i32
    %2 = arith.cmpi ne, %1, %c0_i32_0 : i32
    scf.if %2 {
      %cst_54 = arith.constant 0.000000e+00 : f32
      %102 = vector.broadcast %cst_54 : f32 to vector<9x8xf32>
      %c0_55 = arith.constant 0 : index
      %c0_56 = arith.constant 0 : index
      %103 = vector.load %arg9[%c0_55, %c0_56] : memref<9x8xf32, #tpu.memory_space<vmem>>, vector<9x8xf32>
      tpu.vector_store %arg9[%c0_55, %c0_56], %102 {strides = array<i32>} : memref<9x8xf32, #tpu.memory_space<vmem>>, vector<9x8xf32>,
    } else {
    }
    %c0 = arith.constant 0 : index
    %c0_1 = arith.constant 0 : index
    %c0_2 = arith.constant 0 : index
    %3 = vector.load %arg2[%c0, %c0_1, %c0_2] : memref<1x1x128xf32, #tpu.memory_space<vmem>>, vector<1x1x128xf32>
    %4 = vector.shape_cast %3 : vector<1x1x128xf32> to vector<1x128xf32>
    %c0_3 = arith.constant 0 : index
    %c0_4 = arith.constant 0 : index
    %c0_5 = arith.constant 0 : index
    %5 = vector.load %arg3[%c0_3, %c0_4, %c0_5] : memref<1x1x128xf32, #tpu.memory_space<vmem>>, vector<1x1x128xf32>
    %6 = vector.shape_cast %5 : vector<1x1x128xf32> to vector<1x128xf32>
    %c0_6 = arith.constant 0 : index
    %c0_7 = arith.constant 0 : index
    %c0_8 = arith.constant 0 : index
    %7 = vector.load %arg4[%c0_6, %c0_7, %c0_8] : memref<1x1x128xf32, #tpu.memory_space<vmem>>, vector<1x1x128xf32>
    %8 = vector.shape_cast %7 : vector<1x1x128xf32> to vector<1x128xf32>
    %9 = math.cos %4 : vector<1x128xf32>
    %10 = arith.mulf %9, %9 : vector<1x128xf32>
    %cst = arith.constant 1.000000e+00 : f32
    %11 = vector.broadcast %cst : f32 to vector<1x128xf32>
    %12 = arith.subf %11, %10 : vector<1x128xf32>
    %cst_9 = arith.constant 0.000000e+00 : f32
    %13 = vector.broadcast %cst_9 : f32 to vector<1x128xf32>
    %14 = arith.maximumf %12, %13 : vector<1x128xf32>
    %15 = math.sqrt %14 : vector<1x128xf32>
    %cst_10 = arith.constant 1.000000e+00 : f32
    %16 = vector.broadcast %cst_10 : f32 to vector<1x128xf32>
    %cst_11 = arith.constant -1.000000e+00 : f32
    %17 = vector.broadcast %cst_11 : f32 to vector<1x128xf32>
    %18 = arith.mulf %17, %15 : vector<1x128xf32>
    %19 = arith.mulf %18, %16 : vector<1x128xf32>
    %cst_12 = arith.constant 1.000000e+00 : f32
    %20 = vector.broadcast %cst_12 : f32 to vector<1x128xf32>
    %21 = arith.mulf %20, %9 : vector<1x128xf32>
    %22 = arith.mulf %21, %16 : vector<1x128xf32>
    %cst_13 = arith.constant -3.000000e+00 : f32
    %23 = vector.broadcast %cst_13 : f32 to vector<1x128xf32>
    %24 = arith.mulf %23, %15 : vector<1x128xf32>
    %25 = arith.mulf %24, %19 : vector<1x128xf32>
    %cst_14 = arith.constant 3.000000e+00 : f32
    %26 = vector.broadcast %cst_14 : f32 to vector<1x128xf32>
    %27 = arith.mulf %26, %9 : vector<1x128xf32>
    %28 = arith.mulf %27, %19 : vector<1x128xf32>
    %cst_15 = arith.constant 3.000000e+00 : f32
    %29 = vector.broadcast %cst_15 : f32 to vector<1x128xf32>
    %30 = arith.mulf %29, %9 : vector<1x128xf32>
    %31 = arith.mulf %30, %22 : vector<1x128xf32>
    %cst_16 = arith.constant 1.000000e+00 : f32
    %32 = vector.broadcast %cst_16 : f32 to vector<1x128xf32>
    %33 = arith.mulf %32, %16 : vector<1x128xf32>
    %34 = arith.subf %31, %33 : vector<1x128xf32>
    %cst_17 = arith.constant 2.000000e+00 : f32
    %35 = vector.broadcast %cst_17 : f32 to vector<1x128xf32>
    %36 = arith.divf %34, %35 : vector<1x128xf32>
    %cst_18 = arith.constant 1.7724539 : f32
    %37 = vector.broadcast %cst_18 : f32 to vector<1x128xf32>
    %38 = arith.mulf %37, %16 : vector<1x128xf32>
    %c0_19 = arith.constant 0 : index
    %c0_20 = arith.constant 0 : index
    %39 = vector.load %arg8[%c0_19, %c0_20] : memref<9x128xf32, #tpu.memory_space<vmem>>, vector<1x128xf32>
    tpu.vector_store %arg8[%c0_19, %c0_20], %38 {strides = array<i32>} : memref<9x128xf32, #tpu.memory_space<vmem>>, vector<1x128xf32>,
    %cst_21 = arith.constant 3.06998014 : f32
    %40 = vector.broadcast %cst_21 : f32 to vector<1x128xf32>
    %41 = arith.mulf %40, %22 : vector<1x128xf32>
    %c1 = arith.constant 1 : index
    %c0_22 = arith.constant 0 : index
    %42 = vector.load %arg8[%c1, %c0_22] : memref<9x128xf32, #tpu.memory_space<vmem>>, vector<1x128xf32>
    tpu.vector_store %arg8[%c1, %c0_22], %41 {strides = array<i32>} : memref<9x128xf32, #tpu.memory_space<vmem>>, vector<1x128xf32>,
    %cst_23 = arith.constant 1.000000e+00 : f32
    %43 = vector.broadcast %cst_23 : f32 to vector<1x128xf32>
    %44 = arith.mulf %43, %6 : vector<1x128xf32>
    %45 = math.cos %44 : vector<1x128xf32>
    %cst_24 = arith.constant 1.000000e+00 : f32
    %46 = vector.broadcast %cst_24 : f32 to vector<1x128xf32>
    %47 = arith.mulf %46, %6 : vector<1x128xf32>
    %48 = math.sin %47 : vector<1x128xf32>
    %cst_25 = arith.constant 1.53499007 : f32
    %49 = vector.broadcast %cst_25 : f32 to vector<1x128xf32>
    %50 = arith.mulf %49, %45 : vector<1x128xf32>
    %51 = arith.mulf %50, %19 : vector<1x128xf32>
    %c2 = arith.constant 2 : index
    %c0_26 = arith.constant 0 : index
    %52 = vector.load %arg8[%c2, %c0_26] : memref<9x128xf32, #tpu.memory_space<vmem>>, vector<1x128xf32>
    tpu.vector_store %arg8[%c2, %c0_26], %51 {strides = array<i32>} : memref<9x128xf32, #tpu.memory_space<vmem>>, vector<1x128xf32>,
    %cst_27 = arith.constant -1.53499007 : f32
    %53 = vector.broadcast %cst_27 : f32 to vector<1x128xf32>
    %54 = arith.mulf %53, %48 : vector<1x128xf32>
    %55 = arith.mulf %54, %19 : vector<1x128xf32>
    %c3 = arith.constant 3 : index
    %c0_28 = arith.constant 0 : index
    %56 = vector.load %arg8[%c3, %c0_28] : memref<9x128xf32, #tpu.memory_space<vmem>>, vector<1x128xf32>
    tpu.vector_store %arg8[%c3, %c0_28], %55 {strides = array<i32>} : memref<9x128xf32, #tpu.memory_space<vmem>>, vector<1x128xf32>,
    %cst_29 = arith.constant 3.96332741 : f32
    %57 = vector.broadcast %cst_29 : f32 to vector<1x128xf32>
    %58 = arith.mulf %57, %36 : vector<1x128xf32>
    %c4 = arith.constant 4 : index
    %c0_30 = arith.constant 0 : index
    %59 = vector.load %arg8[%c4, %c0_30] : memref<9x128xf32, #tpu.memory_space<vmem>>, vector<1x128xf32>
    tpu.vector_store %arg8[%c4, %c0_30], %58 {strides = array<i32>} : memref<9x128xf32, #tpu.memory_space<vmem>>, vector<1x128xf32>,
    %cst_31 = arith.constant 1.000000e+00 : f32
    %60 = vector.broadcast %cst_31 : f32 to vector<1x128xf32>
    %61 = arith.mulf %60, %6 : vector<1x128xf32>
    %62 = math.cos %61 : vector<1x128xf32>
    %cst_32 = arith.constant 1.000000e+00 : f32
    %63 = vector.broadcast %cst_32 : f32 to vector<1x128xf32>
    %64 = arith.mulf %63, %6 : vector<1x128xf32>
    %65 = math.sin %64 : vector<1x128xf32>
    %cst_33 = arith.constant 0.660554528 : f32
    %66 = vector.broadcast %cst_33 : f32 to vector<1x128xf32>
    %67 = arith.mulf %66, %62 : vector<1x128xf32>
    %68 = arith.mulf %67, %28 : vector<1x128xf32>
    %c5 = arith.constant 5 : index
    %c0_34 = arith.constant 0 : index
    %69 = vector.load %arg8[%c5, %c0_34] : memref<9x128xf32, #tpu.memory_space<vmem>>, vector<1x128xf32>
    tpu.vector_store %arg8[%c5, %c0_34], %68 {strides = array<i32>} : memref<9x128xf32, #tpu.memory_space<vmem>>, vector<1x128xf32>,
    %cst_35 = arith.constant -0.660554528 : f32
    %70 = vector.broadcast %cst_35 : f32 to vector<1x128xf32>
    %71 = arith.mulf %70, %65 : vector<1x128xf32>
    %72 = arith.mulf %71, %28 : vector<1x128xf32>
    %c6 = arith.constant 6 : index
    %c0_36 = arith.constant 0 : index
    %73 = vector.load %arg8[%c6, %c0_36] : memref<9x128xf32, #tpu.memory_space<vmem>>, vector<1x128xf32>
    tpu.vector_store %arg8[%c6, %c0_36], %72 {strides = array<i32>} : memref<9x128xf32, #tpu.memory_space<vmem>>, vector<1x128xf32>,
    %cst_37 = arith.constant 2.000000e+00 : f32
    %74 = vector.broadcast %cst_37 : f32 to vector<1x128xf32>
    %75 = arith.mulf %74, %6 : vector<1x128xf32>
    %76 = math.cos %75 : vector<1x128xf32>
    %cst_38 = arith.constant 2.000000e+00 : f32
    %77 = vector.broadcast %cst_38 : f32 to vector<1x128xf32>
    %78 = arith.mulf %77, %6 : vector<1x128xf32>
    %79 = math.sin %78 : vector<1x128xf32>
    %cst_39 = arith.constant 0.165138632 : f32
    %80 = vector.broadcast %cst_39 : f32 to vector<1x128xf32>
    %81 = arith.mulf %80, %76 : vector<1x128xf32>
    %82 = arith.mulf %81, %25 : vector<1x128xf32>
    %c7 = arith.constant 7 : index
    %c0_40 = arith.constant 0 : index
    %83 = vector.load %arg8[%c7, %c0_40] : memref<9x128xf32, #tpu.memory_space<vmem>>, vector<1x128xf32>
    tpu.vector_store %arg8[%c7, %c0_40], %82 {strides = array<i32>} : memref<9x128xf32, #tpu.memory_space<vmem>>, vector<1x128xf32>,
    %cst_41 = arith.constant -0.165138632 : f32
    %84 = vector.broadcast %cst_41 : f32 to vector<1x128xf32>
    %85 = arith.mulf %84, %79 : vector<1x128xf32>
    %86 = arith.mulf %85, %25 : vector<1x128xf32>
    %c8 = arith.constant 8 : index
    %c0_42 = arith.constant 0 : index
    %87 = vector.load %arg8[%c8, %c0_42] : memref<9x128xf32, #tpu.memory_space<vmem>>, vector<1x128xf32>
    tpu.vector_store %arg8[%c8, %c0_42], %86 {strides = array<i32>} : memref<9x128xf32, #tpu.memory_space<vmem>>, vector<1x128xf32>,
    %c0_43 = arith.constant 0 : index
    %c0_44 = arith.constant 0 : index
    %88 = vector.load %arg8[%c0_43, %c0_44] : memref<9x128xf32, #tpu.memory_space<vmem>>, vector<9x128xf32>
    %89 = vector.broadcast %8 : vector<1x128xf32> to vector<9x128xf32>
    %90 = arith.mulf %88, %89 : vector<9x128xf32>
    %91 = arith.truncf %90 : vector<9x128xf32> to vector<9x128xbf16>
    %c0_45 = arith.constant 0 : index
    %c0_46 = arith.constant 0 : index
    %c0_47 = arith.constant 0 : index
    %92 = vector.load %arg5[%c0_45, %c0_46, %c0_47] : memref<1x128x8xf32, #tpu.memory_space<vmem>>, vector<1x128x8xf32>
    %93 = vector.shape_cast %92 : vector<1x128x8xf32> to vector<128x8xf32>
    %94 = arith.truncf %93 : vector<128x8xf32> to vector<128x8xbf16>
    %c0_48 = arith.constant 0 : index
    %c0_49 = arith.constant 0 : index
    %95 = vector.load %arg9[%c0_48, %c0_49] : memref<9x8xf32, #tpu.memory_space<vmem>>, vector<9x8xf32>
    %cst_50 = arith.constant dense<0.000000e+00> : vector<9x8xf32>
    %96 = tpu.matmul %91, %94, %cst_50 {dimension_numbers = #tpu.dot_dimension_numbers<[1], [0], [0], [1], [0, 0, 1, 1], [], []>} : vector<9x128xbf16>, vector<128x8xbf16>, vector<9x8xf32> -> vector<9x8xf32>
    %97 = arith.addf %95, %96 : vector<9x8xf32>
    %c0_51 = arith.constant 0 : index
    %c0_52 = arith.constant 0 : index
    %98 = vector.load %arg9[%c0_51, %c0_52] : memref<9x8xf32, #tpu.memory_space<vmem>>, vector<9x8xf32>
    tpu.vector_store %arg9[%c0_51, %c0_52], %97 {strides = array<i32>} : memref<9x8xf32, #tpu.memory_space<vmem>>, vector<9x8xf32>,
    %c3_i32 = arith.constant 3 : i32
    %99 = arith.cmpi eq, %arg1, %c3_i32 : i32
    %100 = arith.extui %99 : i1 to i32
    %c0_i32_53 = arith.constant 0 : i32
    %101 = arith.cmpi ne, %100, %c0_i32_53 : i32
    scf.if %101 {
      %c0_54 = arith.constant 0 : index
      %c0_55 = arith.constant 0 : index
      %102 = vector.load %arg9[%c0_54, %c0_55] : memref<9x8xf32, #tpu.memory_space<vmem>>, vector<9x8xf32>
      %103 = tpu.iota {dimensions = array<i32: 0>} : vector<9x1xi32>
      %cst_56 = arith.constant 0.000000e+00 : f32
      %104 = vector.broadcast %cst_56 : f32 to vector<9x32xf32>
      %c0_i32_57 = arith.constant 0 : i32
      %105 = vector.broadcast %c0_i32_57 : i32 to vector<9x1xi32>
      %106 = arith.cmpi sge, %103, %105 : vector<9x1xi32>
      %c1_i32 = arith.constant 1 : i32
      %107 = vector.broadcast %c1_i32 : i32 to vector<9x1xi32>
      %108 = arith.cmpi slt, %103, %107 : vector<9x1xi32>
      %109 = arith.andi %106, %108 : vector<9x1xi1>
      %cst_58 = arith.constant 0.000000e+00 : f32
      %110 = vector.shape_cast %109 : vector<9x1xi1> to vector<9x1xi1>
      %111 = vector.broadcast %110 : vector<9x1xi1> to vector<9x8xi1>
      %112 = vector.broadcast %cst_58 : f32 to vector<9x8xf32>
      %113 = arith.select %111, %102, %112 : vector<9x8xi1>, vector<9x8xf32>
      %c0_59 = arith.constant 0 : index
      %c0_60 = arith.constant 0 : index
      %c0_61 = arith.constant 0 : index
      %114 = vector.load %arg6[%c0_59, %c0_60, %c0_61] : memref<3x8x32xf32, #tpu.memory_space<vmem>>, vector<1x8x32xf32>
      %115 = vector.shape_cast %114 : vector<1x8x32xf32> to vector<8x32xf32>
      %cst_62 = arith.constant dense<0.000000e+00> : vector<9x32xf32>
      %116 = tpu.matmul %113, %115, %cst_62 {dimension_numbers = #tpu.dot_dimension_numbers<[1], [0], [0], [1], [0, 0, 1, 1], [], []>} : vector<9x8xf32>, vector<8x32xf32>, vector<9x32xf32> -> vector<9x32xf32>
      %117 = arith.addf %104, %116 : vector<9x32xf32>
      %c1_i32_63 = arith.constant 1 : i32
      %118 = vector.broadcast %c1_i32_63 : i32 to vector<9x1xi32>
      %119 = arith.cmpi sge, %103, %118 : vector<9x1xi32>
      %c4_i32 = arith.constant 4 : i32
      %120 = vector.broadcast %c4_i32 : i32 to vector<9x1xi32>
      %121 = arith.cmpi slt, %103, %120 : vector<9x1xi32>
      %122 = arith.andi %119, %121 : vector<9x1xi1>
      %cst_64 = arith.constant 0.000000e+00 : f32
      %123 = vector.shape_cast %122 : vector<9x1xi1> to vector<9x1xi1>
      %124 = vector.broadcast %123 : vector<9x1xi1> to vector<9x8xi1>
      %125 = vector.broadcast %cst_64 : f32 to vector<9x8xf32>
      %126 = arith.select %124, %102, %125 : vector<9x8xi1>, vector<9x8xf32>
      %c1_65 = arith.constant 1 : index
      %c0_66 = arith.constant 0 : index
      %c0_67 = arith.constant 0 : index
      %127 = vector.load %arg6[%c1_65, %c0_66, %c0_67] : memref<3x8x32xf32, #tpu.memory_space<vmem>>, vector<1x8x32xf32>
      %128 = vector.shape_cast %127 : vector<1x8x32xf32> to vector<8x32xf32>
      %cst_68 = arith.constant dense<0.000000e+00> : vector<9x32xf32>
      %129 = tpu.matmul %126, %128, %cst_68 {dimension_numbers = #tpu.dot_dimension_numbers<[1], [0], [0], [1], [0, 0, 1, 1], [], []>} : vector<9x8xf32>, vector<8x32xf32>, vector<9x32xf32> -> vector<9x32xf32>
      %130 = arith.addf %117, %129 : vector<9x32xf32>
      %c4_i32_69 = arith.constant 4 : i32
      %131 = vector.broadcast %c4_i32_69 : i32 to vector<9x1xi32>
      %132 = arith.cmpi sge, %103, %131 : vector<9x1xi32>
      %c9_i32 = arith.constant 9 : i32
      %133 = vector.broadcast %c9_i32 : i32 to vector<9x1xi32>
      %134 = arith.cmpi slt, %103, %133 : vector<9x1xi32>
      %135 = arith.andi %132, %134 : vector<9x1xi1>
      %cst_70 = arith.constant 0.000000e+00 : f32
      %136 = vector.shape_cast %135 : vector<9x1xi1> to vector<9x1xi1>
      %137 = vector.broadcast %136 : vector<9x1xi1> to vector<9x8xi1>
      %138 = vector.broadcast %cst_70 : f32 to vector<9x8xf32>
      %139 = arith.select %137, %102, %138 : vector<9x8xi1>, vector<9x8xf32>
      %c2_71 = arith.constant 2 : index
      %c0_72 = arith.constant 0 : index
      %c0_73 = arith.constant 0 : index
      %140 = vector.load %arg6[%c2_71, %c0_72, %c0_73] : memref<3x8x32xf32, #tpu.memory_space<vmem>>, vector<1x8x32xf32>
      %141 = vector.shape_cast %140 : vector<1x8x32xf32> to vector<8x32xf32>
      %cst_74 = arith.constant dense<0.000000e+00> : vector<9x32xf32>
      %142 = tpu.matmul %139, %141, %cst_74 {dimension_numbers = #tpu.dot_dimension_numbers<[1], [0], [0], [1], [0, 0, 1, 1], [], []>} : vector<9x8xf32>, vector<8x32xf32>, vector<9x32xf32> -> vector<9x32xf32>
      %143 = arith.addf %130, %142 : vector<9x32xf32>
      %cst_75 = arith.constant 0.000000e+00 : f32
      %144 = vector.broadcast %cst_75 : f32 to vector<9x32xf32>
      %145 = arith.cmpf oge, %143, %144 : vector<9x32xf32>
      %cst_76 = arith.constant 0.00999999977 : f32
      %146 = vector.broadcast %cst_76 : f32 to vector<9x32xf32>
      %147 = arith.mulf %146, %143 : vector<9x32xf32>
      %148 = arith.select %145, %143, %147 : vector<9x32xi1>, vector<9x32xf32>
      %c0_77 = arith.constant 0 : index
      %c0_78 = arith.constant 0 : index
      %c0_79 = arith.constant 0 : index
      %149 = vector.load %arg7[%c0_77, %c0_78, %c0_79] : memref<1x9x32xf32, #tpu.memory_space<vmem>>, vector<1x9x32xf32>
      %150 = vector.shape_cast %149 : vector<1x9x32xf32> to vector<9x32xf32>
      %151 = vector.shape_cast %148 : vector<9x32xf32> to vector<1x9x32xf32>
      tpu.vector_store %arg7[%c0_77, %c0_78, %c0_79], %151 {strides = array<i32>} : memref<1x9x32xf32, #tpu.memory_space<vmem>>, vector<1x9x32xf32>,
    } else {
    }
    return
  }
  func.func @transform_0(%arg0: i32, %arg1: i32) -> (i32, i32, i32) {
    %c0_i32 = arith.constant 0 : i32
    %c0_i32_0 = arith.constant 0 : i32
    return %arg0, %c0_i32, %arg1 : i32, i32, i32
  }
  func.func @transform_1(%arg0: i32, %arg1: i32) -> (i32, i32, i32) {
    %c0_i32 = arith.constant 0 : i32
    %c0_i32_0 = arith.constant 0 : i32
    return %arg0, %c0_i32, %arg1 : i32, i32, i32
  }
  func.func @transform_2(%arg0: i32, %arg1: i32) -> (i32, i32, i32) {
    %c0_i32 = arith.constant 0 : i32
    %c0_i32_0 = arith.constant 0 : i32
    return %arg0, %c0_i32, %arg1 : i32, i32, i32
  }
  func.func @transform_3(%arg0: i32, %arg1: i32) -> (i32, i32, i32) {
    %c0_i32 = arith.constant 0 : i32
    %c0_i32_0 = arith.constant 0 : i32
    return %arg0, %arg1, %c0_i32 : i32, i32, i32
  }
  func.func @transform_4(%arg0: i32, %arg1: i32) -> (i32, i32, i32) {
    %c0_i32 = arith.constant 0 : i32
    %c0_i32_0 = arith.constant 0 : i32
    %c0_i32_1 = arith.constant 0 : i32
    %c0_i32_2 = arith.constant 0 : i32
    return %c0_i32, %c0_i32_0, %c0_i32_1 : i32, i32, i32
  }
  func.func @transform_5(%arg0: i32, %arg1: i32) -> (i32, i32, i32) {
    %c0_i32 = arith.constant 0 : i32
    %c0_i32_0 = arith.constant 0 : i32
    %c0_i32_1 = arith.constant 0 : i32
    return %arg0, %c0_i32, %c0_i32_0 : i32, i32, i32
  }
}

</mosaic_0001>

<llo_original>
// kernel: tpu_custom_call.1
$region0: #{tpu_custom_call.1}
  #allocation0 [shape = 'u32[]', space=smem, size = 0x4, offset = 0x4, fixed_abs, tag = 'smem constant byte address 0x4 - core index']
  #allocation1 [shape = 'u32[144,128]{1,0:T(1,128)}', space=vmem, size = 0x12000, scoped, tag = 'internal scratch']
  #allocation2 [shape = 'f32[9,128]{1,0:T(8,128)}', space=vmem, size = 0x2000, scoped, tag = 'scratch operand']
  #allocation3 [shape = 'f32[9,8]{1,0:T(8,128)}', space=vmem, size = 0x2000, scoped, tag = 'scratch operand']
  %s0 = inlined_call_operand.vmem [shape: f32[2,1,512], index: 0, kind: input, shape index: {}]
  %s1 = inlined_call_operand.vmem [shape: f32[2,1,512], index: 1, kind: input, shape index: {}]
  %s2 = inlined_call_operand.vmem [shape: f32[2,1,512], index: 2, kind: input, shape index: {}]
  %s3 = inlined_call_operand.vmem [shape: f32[2,512,8], index: 3, kind: input, shape index: {}]
  %s4 = inlined_call_operand.vmem [shape: f32[3,8,32], index: 4, kind: input, shape index: {}]
  %s5 = inlined_call_operand.vmem [shape: f32[2,9,32], index: 5, kind: output, shape index: {}]
  %s6 = sld [smem:[#allocation0]]
  $region61: #{tpu_custom_call.1} parent=0
    _
  %s8 = ssub.s32 1, %s6
  %s9 = scalar_select 0, %s8, %s6
  loop: start=0, step=1, limit=10
  $region2: #{tpu_custom_call.1} parent=0 // loop_pre_header
    _
  $region3: #{tpu_custom_call.1} parent=0 // loop_header
    %s11 = sphi 0, %s15
    %p12 = scmp.ge.s32.totalorder %s11, 10
    %s18 = sphi 0, %s30
    %s19 = sphi 0, %s26
    %s20 = sphi 0, %s18
    %s21 = sphi 0, %s19
    %s22 = sphi 0, %s20
    %s23 = sphi 0, %s21
    %s35 = sphi 0, %s37
    %s38 = sphi 0, %s35
    %s39 = sphi 0, %s38
    %s55 = sphi 0, %s39
    %s63 = sphi 0, %s65
    %s66 = sphi 0, %s63
    %s67 = sphi 0, %s66
    %s83 = sphi 0, %s67
    %s91 = sphi 0, %s93
    %s94 = sphi 0, %s91
    %s95 = sphi 0, %s94
    %s111 = sphi 0, %s95
    %s119 = sphi 0, %s121
    %s122 = sphi 0, %s119
    %s123 = sphi 0, %s122
    %s139 = sphi 0, %s123
    %s143 = sphi 0, %s143
    %s145 = sphi 0, %s143
    %s146 = sphi 0, %s145
    %s160 = sphi 0, %s146
    %s166 = sphi 0, %s168
    %s169 = sphi 0, %s166
    %s170 = sphi 0, %s169
    %s186 = sphi 0, %s170
  $region4: #{tpu_custom_call.1} parent=0 // loop_header_branch
    %14 = sbr.rel (%p12) target = $region8
  $region5: #{tpu_custom_call.1} parent=0 // loop_body
    %s16 = ssub.s32 %s11, 1
    %s17 = ssub.s32 %s11, 2
    %s24 = sadd.s32 1, %s19
    %p25 = scmp.ge.s32.totalorder %s24, 4
    %s26 = scalar_select %p25, 0, %s24
    %s27 = sadd.s32 1, %s18
    %s28 = scalar_select %p25, %s27, %s18
    %p29 = scmp.ge.s32.totalorder %s28, 2
    %s30 = scalar_select %p29, 0, %s28
    %s31 = ssub.s32 %s18, %s30
    %s32 = ssub.s32 %s19, %s26
    %s33 = sor.u32 %s31, %s32
    %p34 = scmp.eq.s32.totalorder %s33, 0
    %s36 = sadd.s32 %s35, 1
    %s37 = scalar_select %p34, %s35, %s36
    %p40 = pneg %p34
    %p41 = scmp.eq.s32.totalorder %s11, 7
    %p42 = por %p40, %p41
    %p43 = scmp.ne.s32.totalorder %s35, %s38
    %p44 = scmp.eq.s32.totalorder %s11, 0
    %p45 = por %p43, %p44
    %p46 = scmp.ne.s32.totalorder %s35, %s38
    %p47 = scmp.eq.s32.totalorder %s16, 7
    %p48 = por %p46, %p47
    %p49 = scmp.ne.s32.totalorder %s38, %s39
    %p50 = scmp.eq.s32.totalorder %s16, 0
    %p51 = por %p49, %p50
    %p52 = scmp.ne.s32.totalorder %s38, %s39
    %p53 = scmp.eq.s32.totalorder %s17, 7
    %p54 = por %p52, %p53
    %p56 = scmp.ne.s32.totalorder %s39, %s55
    %p57 = scmp.eq.s32.totalorder %s17, 0
    %p58 = por %p56, %p57
    %s59 = ssub.s32 %s18, %s30
    %s60 = ssub.s32 %s19, %s26
    %s61 = sor.u32 %s59, %s60
    %p62 = scmp.eq.s32.totalorder %s61, 0
    %s64 = sadd.s32 %s63, 1
    %s65 = scalar_select %p62, %s63, %s64
    %p68 = pneg %p62
    %p69 = scmp.eq.s32.totalorder %s11, 7
    %p70 = por %p68, %p69
    %p71 = scmp.ne.s32.totalorder %s63, %s66
    %p72 = scmp.eq.s32.totalorder %s11, 0
    %p73 = por %p71, %p72
    %p74 = scmp.ne.s32.totalorder %s63, %s66
    %p75 = scmp.eq.s32.totalorder %s16, 7
    %p76 = por %p74, %p75
    %p77 = scmp.ne.s32.totalorder %s66, %s67
    %p78 = scmp.eq.s32.totalorder %s16, 0
    %p79 = por %p77, %p78
    %p80 = scmp.ne.s32.totalorder %s66, %s67
    %p81 = scmp.eq.s32.totalorder %s17, 7
    %p82 = por %p80, %p81
    %p84 = scmp.ne.s32.totalorder %s67, %s83
    %p85 = scmp.eq.s32.totalorder %s17, 0
    %p86 = por %p84, %p85
    %s87 = ssub.s32 %s18, %s30
    %s88 = ssub.s32 %s19, %s26
    %s89 = sor.u32 %s87, %s88
    %p90 = scmp.eq.s32.totalorder %s89, 0
    %s92 = sadd.s32 %s91, 1
    %s93 = scalar_select %p90, %s91, %s92
    %p96 = pneg %p90
    %p97 = scmp.eq.s32.totalorder %s11, 7
    %p98 = por %p96, %p97
    %p99 = scmp.ne.s32.totalorder %s91, %s94
    %p100 = scmp.eq.s32.totalorder %s11, 0
    %p101 = por %p99, %p100
    %p102 = scmp.ne.s32.totalorder %s91, %s94
    %p103 = scmp.eq.s32.totalorder %s16, 7
    %p104 = por %p102, %p103
    %p105 = scmp.ne.s32.totalorder %s94, %s95
    %p106 = scmp.eq.s32.totalorder %s16, 0
    %p107 = por %p105, %p106
    %p108 = scmp.ne.s32.totalorder %s94, %s95
    %p109 = scmp.eq.s32.totalorder %s17, 7
    %p110 = por %p108, %p109
    %p112 = scmp.ne.s32.totalorder %s95, %s111
    %p113 = scmp.eq.s32.totalorder %s17, 0
    %p114 = por %p112, %p113
    %s115 = ssub.s32 %s18, %s30
    %s116 = ssub.s32 %s19, %s26
    %s117 = sor.u32 %s115, %s116
    %p118 = scmp.eq.s32.totalorder %s117, 0
    %s120 = sadd.s32 %s119, 1
    %s121 = scalar_select %p118, %s119, %s120
    %p124 = pneg %p118
    %p125 = scmp.eq.s32.totalorder %s11, 7
    %p126 = por %p124, %p125
    %p127 = scmp.ne.s32.totalorder %s119, %s122
    %p128 = scmp.eq.s32.totalorder %s11, 0
    %p129 = por %p127, %p128
    %p130 = scmp.ne.s32.totalorder %s119, %s122
    %p131 = scmp.eq.s32.totalorder %s16, 7
    %p132 = por %p130, %p131
    %p133 = scmp.ne.s32.totalorder %s122, %s123
    %p134 = scmp.eq.s32.totalorder %s16, 0
    %p135 = por %p133, %p134
    %p136 = scmp.ne.s32.totalorder %s122, %s123
    %p137 = scmp.eq.s32.totalorder %s17, 7
    %p138 = por %p136, %p137
    %p140 = scmp.ne.s32.totalorder %s123, %s139
    %p141 = scmp.eq.s32.totalorder %s17, 0
    %p142 = por %p140, %p141
    %s144 = sadd.s32 %s143, 1
    %p147 = scmp.eq.s32.totalorder %s11, 7
    %p148 = scmp.ne.s32.totalorder %s143, %s145
    %p149 = scmp.eq.s32.totalorder %s11, 0
    %p150 = por %p148, %p149
    %p151 = scmp.ne.s32.totalorder %s143, %s145
    %p152 = scmp.eq.s32.totalorder %s16, 7
    %p153 = por %p151, %p152
    %p154 = scmp.ne.s32.totalorder %s145, %s146
    %p155 = scmp.eq.s32.totalorder %s16, 0
    %p156 = por %p154, %p155
    %p157 = scmp.ne.s32.totalorder %s145, %s146
    %p158 = scmp.eq.s32.totalorder %s17, 7
    %p159 = por %p157, %p158
    %p161 = scmp.ne.s32.totalorder %s146, %s160
    %p162 = scmp.eq.s32.totalorder %s17, 0
    %p163 = por %p161, %p162
    %s164 = ssub.s32 %s18, %s30
    %p165 = scmp.eq.s32.totalorder %s164, 0
    %s167 = sadd.s32 %s166, 1
    %s168 = scalar_select %p165, %s166, %s167
    %p171 = pneg %p165
    %p172 = scmp.eq.s32.totalorder %s11, 7
    %p173 = por %p171, %p172
    %p174 = scmp.ne.s32.totalorder %s166, %s169
    %p175 = scmp.eq.s32.totalorder %s11, 0
    %p176 = por %p174, %p175
    %p177 = scmp.ne.s32.totalorder %s166, %s169
    %p178 = scmp.eq.s32.totalorder %s16, 7
    %p179 = por %p177, %p178
    %p180 = scmp.ne.s32.totalorder %s169, %s170
    %p181 = scmp.eq.s32.totalorder %s16, 0
    %p182 = por %p180, %p181
    %p183 = scmp.ne.s32.totalorder %s169, %s170
    %p184 = scmp.eq.s32.totalorder %s17, 7
    %p185 = por %p183, %p184
    %p187 = scmp.ne.s32.totalorder %s170, %s186
    %p188 = scmp.eq.s32.totalorder %s17, 0
    %p189 = por %p187, %p188
    %p190 = scmp.le.s32.totalorder 1, %s11
    %p191 = scmp.lt.s32.totalorder %s11, 9
    %p192 = pnand %p190, %p191
    %p193 = pneg %p192
    // Predicated region
    $region9: #{tpu_custom_call.1} parent=5 // pred_check
      _
    $region10: #{tpu_custom_call.1} parent=5 // pred_check_branch
      %195 = sbr.rel (%p192) target = $region12
    $region11: #{tpu_custom_call.1} parent=5 // pred_region
      %s196 = ssub.s32 %s11, 1
      // Predicated region
      $region13: #{tpu_custom_call.1} parent=11 // pred_check
        %p197 = pneg %p156
      $region14: #{tpu_custom_call.1} parent=11 // pred_check_branch
        %199 = sbr.rel (%p197) target = $region16
      $region15: #{tpu_custom_call.1} parent=11 // pred_region
        _
      $region16: #{tpu_custom_call.1} parent=11 // pred_fallthru
        _
    $region12: #{tpu_custom_call.1} parent=5 // pred_fallthru
      _
    %p200 = scmp.lt.s32.totalorder %s11, 8
    // Predicated region
    $region17: #{tpu_custom_call.1} parent=5 // pred_check
      %p201 = pneg %p200
    $region18: #{tpu_custom_call.1} parent=5 // pred_check_branch
      %203 = sbr.rel (%p201) target = $region20
    $region19: #{tpu_custom_call.1} parent=5 // pred_region
      // Predicated region
      $region21: #{tpu_custom_call.1} parent=19 // pred_check
        %p204 = pneg %p45
      $region22: #{tpu_custom_call.1} parent=19 // pred_check_branch
        %206 = sbr.rel (%p204) target = $region24
      $region23: #{tpu_custom_call.1} parent=19 // pred_region
        %p207 = scmp.lt.s32.totalorder %s18, 1
        %s208 = scalar_select %p207, %s18, 1
        %p209 = scmp.lt.s32.totalorder %s19, 3
        %s210 = scalar_select %p209, %s19, 3
        %s211 = smul.addr %s208, 4
        %s212 = sadd.s32 %s210, %s211
        %s213 = scalar_lea.vmem %s0, %s212
      $region24: #{tpu_custom_call.1} parent=19 // pred_fallthru
        _
      // Predicated region
      $region25: #{tpu_custom_call.1} parent=19 // pred_check
        %p214 = pneg %p73
      $region26: #{tpu_custom_call.1} parent=19 // pred_check_branch
        %216 = sbr.rel (%p214) target = $region28
      $region27: #{tpu_custom_call.1} parent=19 // pred_region
        %p217 = scmp.lt.s32.totalorder %s18, 1
        %s218 = scalar_select %p217, %s18, 1
        %p219 = scmp.lt.s32.totalorder %s19, 3
        %s220 = scalar_select %p219, %s19, 3
        %s221 = smul.addr %s218, 4
        %s222 = sadd.s32 %s220, %s221
        %s223 = scalar_lea.vmem %s1, %s222
      $region28: #{tpu_custom_call.1} parent=19 // pred_fallthru
        _
      // Predicated region
      $region29: #{tpu_custom_call.1} parent=19 // pred_check
        %p224 = pneg %p101
      $region30: #{tpu_custom_call.1} parent=19 // pred_check_branch
        %226 = sbr.rel (%p224) target = $region32
      $region31: #{tpu_custom_call.1} parent=19 // pred_region
        %p227 = scmp.lt.s32.totalorder %s18, 1
        %s228 = scalar_select %p227, %s18, 1
        %p229 = scmp.lt.s32.totalorder %s19, 3
        %s230 = scalar_select %p229, %s19, 3
        %s231 = smul.addr %s228, 4
        %s232 = sadd.s32 %s230, %s231
        %s233 = scalar_lea.vmem %s2, %s232
      $region32: #{tpu_custom_call.1} parent=19 // pred_fallthru
        _
      // Predicated region
      $region33: #{tpu_custom_call.1} parent=19 // pred_check
        %p234 = pneg %p129
      $region34: #{tpu_custom_call.1} parent=19 // pred_check_branch
        %236 = sbr.rel (%p234) target = $region36
      $region35: #{tpu_custom_call.1} parent=19 // pred_region
        %s237 = smul.u32 16, %s19
        %p238 = scmp.lt.s32.totalorder %s18, 1
        %s239 = scalar_select %p238, %s18, 1
        %p240 = scmp.lt.s32.totalorder %s237, 63
        %s241 = scalar_select %p240, %s237, 63
        %s242 = smul.addr %s239, 64
        %s243 = sadd.s32 %s241, %s242
        %s244 = smul.addr %s243, 8
        %s245 = scalar_lea.vmem %s3, %s244
        %s246 = smul.u32 16, %s19
      $region36: #{tpu_custom_call.1} parent=19 // pred_fallthru
        _
    $region20: #{tpu_custom_call.1} parent=5 // pred_fallthru
      _
    %p247 = scmp.le.s32.totalorder 1, %s11
    %p248 = scmp.lt.s32.totalorder %s11, 9
    %p249 = pnand %p247, %p248
    %p250 = pneg %p249
    // Predicated region
    $region37: #{tpu_custom_call.1} parent=5 // pred_check
      _
    $region38: #{tpu_custom_call.1} parent=5 // pred_check_branch
      %252 = sbr.rel (%p249) target = $region40
    $region39: #{tpu_custom_call.1} parent=5 // pred_region
      %s253 = ssub.s32 %s11, 1
      %p254 = scmp.lt.s32.totalorder %s20, 1
      %s255 = scalar_select %p254, %s20, 1
      %p256 = scmp.lt.s32.totalorder %s21, 3
      %s257 = scalar_select %p256, %s21, 3
      %s258 = smul.addr %s255, 4
      %s259 = sadd.s32 %s257, %s258
      %s260 = scalar_lea.vmem %s0, %s259
      %p261 = pneg %p51
      %p262 = pneg %p48
      %p263 = scmp.lt.s32.totalorder %s20, 1
      %s264 = scalar_select %p263, %s20, 1
      %p265 = scmp.lt.s32.totalorder %s21, 3
      %s266 = scalar_select %p265, %s21, 3
      %s267 = smul.addr %s264, 4
      %s268 = sadd.s32 %s266, %s267
      %s269 = scalar_lea.vmem %s1, %s268
      %p270 = pneg %p79
      %p271 = pneg %p76
      %p272 = scmp.lt.s32.totalorder %s20, 1
      %s273 = scalar_select %p272, %s20, 1
      %p274 = scmp.lt.s32.totalorder %s21, 3
      %s275 = scalar_select %p274, %s21, 3
      %s276 = smul.addr %s273, 4
      %s277 = sadd.s32 %s275, %s276
      %s278 = scalar_lea.vmem %s2, %s277
      %p279 = pneg %p107
      %p280 = pneg %p104
      %s281 = smul.u32 16, %s21
      %p282 = scmp.lt.s32.totalorder %s20, 1
      %s283 = scalar_select %p282, %s20, 1
      %p284 = scmp.lt.s32.totalorder %s281, 63
      %s285 = scalar_select %p284, %s281, 63
      %s286 = smul.addr %s283, 64
      %s287 = sadd.s32 %s285, %s286
      %s288 = smul.addr %s287, 8
      %s289 = scalar_lea.vmem %s3, %s288
      %p290 = pneg %p135
      %p291 = pneg %p132
      %p292 = pneg %p156
      %p293 = pneg %p153
      %p294 = pneg %p182
      %p295 = pneg %p179
      %p296 = scmp.lt.s32.totalorder %s20, 1
      %s297 = scalar_select %p296, %s20, 1
      %s298 = smul.addr %s297, 2
      %s299 = smul.addr %s298, 8
      %s300 = scalar_lea.vmem %s5, %s299
      %p301 = scmp.lt.s32.totalorder %s20, 1
      %s302 = scalar_select %p301, %s20, 1
      %p303 = scmp.lt.s32.totalorder %s21, 3
      %s304 = scalar_select %p303, %s21, 3
      %s305 = smul.addr %s302, 4
      %s306 = sadd.s32 %s304, %s305
      %s307 = scalar_lea.vmem %s0, %s306
      %p308 = scmp.lt.s32.totalorder %s20, 1
      %s309 = scalar_select %p308, %s20, 1
      %p310 = scmp.lt.s32.totalorder %s21, 3
      %s311 = scalar_select %p310, %s21, 3
      %s312 = smul.addr %s309, 4
      %s313 = sadd.s32 %s311, %s312
      %s314 = scalar_lea.vmem %s1, %s313
      %p315 = scmp.lt.s32.totalorder %s20, 1
      %s316 = scalar_select %p315, %s20, 1
      %p317 = scmp.lt.s32.totalorder %s21, 3
      %s318 = scalar_select %p317, %s21, 3
      %s319 = smul.addr %s316, 4
      %s320 = sadd.s32 %s318, %s319
      %s321 = scalar_lea.vmem %s2, %s320
      %s322 = smul.u32 16, %s21
      %p323 = scmp.lt.s32.totalorder %s20, 1
      %s324 = scalar_select %p323, %s20, 1
      %p325 = scmp.lt.s32.totalorder %s322, 63
      %s326 = scalar_select %p325, %s322, 63
      %s327 = smul.addr %s324, 64
      %s328 = sadd.s32 %s326, %s327
      %s329 = smul.addr %s328, 8
      %s330 = scalar_lea.vmem %s3, %s329
      %s331 = smul.u32 16, %s21
      %p332 = scmp.lt.s32.totalorder %s20, 1
      %s333 = scalar_select %p332, %s20, 1
      %s334 = smul.addr %s333, 2
      %s335 = smul.addr %s334, 8
      %s336 = scalar_lea.vmem %s5, %s335
      %p338 = scmp.eq.s32.totalorder %s21, 0
      // Predicated region
      $region41: #{tpu_custom_call.1} parent=39 // pred_check
        %p339 = pneg %p338
      $region42: #{tpu_custom_call.1} parent=39 // pred_check_branch
        %341 = sbr.rel (%p339) target = $region44
      $region43: #{tpu_custom_call.1} parent=39 // pred_region
        %vm342 = vcmask 64512
        %343 = vst.msk [vmem:[#allocation3] sm:$0xff] %vm342, 0.0
        %vm344 = vcmask 57344
        %345 = vst.msk [vmem:[#allocation3 + $0x8] sm:$0x1] %vm344, 0.0
      $region44: #{tpu_custom_call.1} parent=39 // pred_fallthru
        _
      %v346 = vld [vmem:[%s307] sm:$0x1]
      %v347 = vld [vmem:[%s314] sm:$0x1]
      %v348 = vld [vmem:[%s321] sm:$0x1]
      %v349 = vand.u32 2147483647, %v346
      %vm350 = vcmp.le.f32.partialorder %v349, 0.7853982
      %vm351 = vcmp.lt.s32.totalorder %v346, 0
      %v352 = vand.u32 %v346, 2139095040
      %v353 = vshrl.u32 %v352, 23
      %v354 = vsub.s32 %v353, 127
      %v355 = vand.u32 2147483647, %v346
      %v356 = vand.u32 %v355, 8388607
      %v357 = vor.u32 %v356, 8388608
      %v358 = vsub.s32 0, %v357
      %v359 = vadd.s32 %v354, 1
      %vm360 = vcmp.gt.s32.totalorder %v359, 0
      %v361 = vsel %vm360, %v359, 0
      %v362 = vshrl.u32 %v361, 5
      %v363 = vand.u32 %v361, 31
      %v364 = vsub.s32 32, %v363
      %v365 = vshrl.u32 683565275, %v364
      %v366 = vshll.u32 683565275, %v363
      %v367 = vshrl.u32 2475754826, %v364
      %v368 = vor.u32 %v366, %v367
      %v369 = vshll.u32 2475754826, %v363
      %v370 = vshrl.u32 2131351028, %v364
      %v371 = vor.u32 %v369, %v370
      %v372 = vshll.u32 2131351028, %v363
      %v373 = vshrl.u32 2102212464, %v364
      %v374 = vor.u32 %v372, %v373
      %v375 = vshll.u32 2102212464, %v363
      %v376 = vshrl.u32 920167782, %v364
      %v377 = vor.u32 %v375, %v376
      %v378 = vshll.u32 920167782, %v363
      %v379 = vshrl.u32 1326507024, %v364
      %v380 = vor.u32 %v378, %v379
      %vm381 = vcmp.lt.s32.totalorder %v362, 1
      %vm382 = vcmp.lt.s32.totalorder %v362, 2
      %vm383 = vcmp.lt.s32.totalorder %v362, 3
      %vm384 = vcmp.lt.s32.totalorder %v362, 4
      %v385 = vsel %vm381, %v365, %v368
      %v386 = vsel %vm384, %v374, 2102212464
      %v387 = vsel %vm383, %v371, %v386
      %v388 = vsel %vm382, %v385, %v387
      %v389 = vsel %vm381, %v368, %v371
      %v390 = vsel %vm384, %v377, 920167782
      %v391 = vsel %vm383, %v374, %v390
      %v392 = vsel %vm382, %v389, %v391
      %v393 = vsel %vm381, %v371, %v374
      %v394 = vsel %vm384, %v380, 1326507024
      %v395 = vsel %vm383, %v377, %v394
      %v396 = vsel %vm382, %v393, %v395
      %v397 = vshll.u32 %v357, 8
      %v398 = vmul.u32.u64.compose %v397, %v396
      %v399 = vextract.low.u32 %v398
      %v400 = vextract.high.u32 %v398
      %v401 = vmul.u32.u64.compose %v397, %v392
      %v402 = vextract.low.u32 %v401
      %v403 = vextract.high.u32 %v401
      %v404 = vmul.u32 %v397, %v388
      %v405 = vadd.s32 %v400, %v402
      %vm406 = vc.u32 %v400, %v402
      %v407 = vadd.s32 %v403, 1
      %v408 = vsel %vm406, %v407, %v403
      %v409 = vadd.s32 %v404, %v408
      %v410 = vadd.s32 %v409, 536870912
      %v411 = vshrl.u32 %v410, 30
      %v412 = vshll.u32 %v411, 30
      %v413 = vsub.s32 %v409, %v412
      %vm414 = vcmp.lt.s32.totalorder %v413, 0
      %v415 = vsub.s32 0, %v413
      %v416 = vsel %vm414, %v415, %v413
      %v417 = vclz %v416
      %v418 = vsub.s32 %v417, 2
      %vm419 = vcmp.gt.s32.totalorder 0, %v418
      %v420 = vsel %vm419, 0, %v418
      %v421 = vsub.s32 32, %v420
      %v422 = vshll.u32 %v413, %v420
      %v423 = vshrl.u32 %v405, %v421
      %v424 = vor.u32 %v422, %v423
      %v425 = vsub.s32 4294967266, %v420
      %v426 = vadd.s32 %v425, 127
      %v427 = vshll.u32 %v426, 23
      %v428 = vor.u32 4788187, %v427
      %v429 = vand.u32 2147483647, %v428
      %v431 = vcvt.s32.f32 %v424
      %v432 = vmul.f32 %v431, %v429
      %v433 = vxor.u32 %v432, 2147483648
      %v434 = vsel %vm351, %v433, %v432
      %v435 = vsub.s32 4, %v411
      %v436 = vsel %vm351, %v435, %v411
      %v437 = vsel %vm350, %v346, %v434
      %v438 = vsel %vm350, 0, %v436
      %v439 = vcosq.f32.pop %v437
      %v440 = vsinq.f32.pop %v437
      %vm441 = vweird.f32 %v346
      %v442 = vand.u32 %v438, 3
      %vm443 = vcmp.lt.s32.totalorder %v442, 2
      %vm444 = vcmp.eq.s32.totalorder %v442, 0
      %v445 = vxor.u32 %v440, 2147483648
      %v446 = vsel %vm444, %v439, %v445
      %vm447 = vcmp.eq.s32.totalorder %v442, 2
      %v448 = vxor.u32 %v439, 2147483648
      %v449 = vsel %vm447, %v448, %v440
      %v450 = vsel %vm443, %v446, %v449
      %v451 = vsel %vm441, nan, %v450
      %v452 = vmul.f32 %v451, %v451
      %v453 = vsub.f32 1.0, %v452
      %v454 = vmax.f32 %v453, 0.0
      %v455 = vrsqrt.pop %v454
      %v456 = vmul.f32 %v454, %v455
      %vm457 = vcmp.eq.f32.partialorder %v454, inf
      %v458 = vsel %vm457, %v454, %v456
      %vm459 = vcmp.eq.f32.partialorder %v454, 0.0
      %v460 = vand.u32 %v454, 2147483648
      %v461 = vsel %vm459, %v460, %v458
      %v462 = vmul.f32 %v461, -1.0
      %v463 = vmul.f32 %v461, -3.0
      %v464 = vmul.f32 %v463, %v462
      %v465 = vmul.f32 %v451, 3.0
      %v466 = vmul.f32 %v465, %v462
      %v467 = vmul.f32 %v465, %v451
      %v468 = vsub.f32 %v467, 1.0
      %v469 = vrcp.pop 2.0
      %v470 = vmul.f32 %v468, %v469
      %471 = vst [vmem:[#allocation2] sm:$0x1] 1.7724539
      %v472 = vmul.f32 %v451, 3.0699801
      %473 = vst [vmem:[#allocation2 + $0x1] sm:$0x1] %v472
      %v474 = vand.u32 2147483647, %v347
      %vm475 = vcmp.le.f32.partialorder %v474, 0.7853982
      %vm476 = vcmp.lt.s32.totalorder %v347, 0
      %v477 = vand.u32 %v347, 2139095040
      %v478 = vshrl.u32 %v477, 23
      %v479 = vsub.s32 %v478, 127
      %v480 = vand.u32 2147483647, %v347
      %v481 = vand.u32 %v480, 8388607
      %v482 = vor.u32 %v481, 8388608
      %v483 = vsub.s32 0, %v482
      %v484 = vadd.s32 %v479, 1
      %vm485 = vcmp.gt.s32.totalorder %v484, 0
      %v486 = vsel %vm485, %v484, 0
      %v487 = vshrl.u32 %v486, 5
      %v488 = vand.u32 %v486, 31
      %v489 = vsub.s32 32, %v488
      %v490 = vshrl.u32 683565275, %v489
      %v491 = vshll.u32 683565275, %v488
      %v492 = vshrl.u32 2475754826, %v489
      %v493 = vor.u32 %v491, %v492
      %v494 = vshll.u32 2475754826, %v488
      %v495 = vshrl.u32 2131351028, %v489
      %v496 = vor.u32 %v494, %v495
      %v497 = vshll.u32 2131351028, %v488
      %v498 = vshrl.u32 2102212464, %v489
      %v499 = vor.u32 %v497, %v498
      %v500 = vshll.u32 2102212464, %v488
      %v501 = vshrl.u32 920167782, %v489
      %v502 = vor.u32 %v500, %v501
      %v503 = vshll.u32 920167782, %v488
      %v504 = vshrl.u32 1326507024, %v489
      %v505 = vor.u32 %v503, %v504
      %vm506 = vcmp.lt.s32.totalorder %v487, 1
      %vm507 = vcmp.lt.s32.totalorder %v487, 2
      %vm508 = vcmp.lt.s32.totalorder %v487, 3
      %vm509 = vcmp.lt.s32.totalorder %v487, 4
      %v510 = vsel %vm506, %v490, %v493
      %v511 = vsel %vm509, %v499, 2102212464
      %v512 = vsel %vm508, %v496, %v511
      %v513 = vsel %vm507, %v510, %v512
      %v514 = vsel %vm506, %v493, %v496
      %v515 = vsel %vm509, %v502, 920167782
      %v516 = vsel %vm508, %v499, %v515
      %v517 = vsel %vm507, %v514, %v516
      %v518 = vsel %vm506, %v496, %v499
      %v519 = vsel %vm509, %v505, 1326507024
      %v520 = vsel %vm508, %v502, %v519
      %v521 = vsel %vm507, %v518, %v520
      %v522 = vshll.u32 %v482, 8
      %v523 = vmul.u32.u64.compose %v522, %v521
      %v524 = vextract.low.u32 %v523
      %v525 = vextract.high.u32 %v523
      %v526 = vmul.u32.u64.compose %v522, %v517
      %v527 = vextract.low.u32 %v526
      %v528 = vextract.high.u32 %v526
      %v529 = vmul.u32 %v522, %v513
      %v530 = vadd.s32 %v525, %v527
      %vm531 = vc.u32 %v525, %v527
      %v532 = vadd.s32 %v528, 1
      %v533 = vsel %vm531, %v532, %v528
      %v534 = vadd.s32 %v529, %v533
      %v535 = vadd.s32 %v534, 536870912
      %v536 = vshrl.u32 %v535, 30
      %v537 = vshll.u32 %v536, 30
      %v538 = vsub.s32 %v534, %v537
      %vm539 = vcmp.lt.s32.totalorder %v538, 0
      %v540 = vsub.s32 0, %v538
      %v541 = vsel %vm539, %v540, %v538
      %v542 = vclz %v541
      %v543 = vsub.s32 %v542, 2
      %vm544 = vcmp.gt.s32.totalorder 0, %v543
      %v545 = vsel %vm544, 0, %v543
      %v546 = vsub.s32 32, %v545
      %v547 = vshll.u32 %v538, %v545
      %v548 = vshrl.u32 %v530, %v546
      %v549 = vor.u32 %v547, %v548
      %v550 = vsub.s32 4294967266, %v545
      %v551 = vadd.s32 %v550, 127
      %v552 = vshll.u32 %v551, 23
      %v553 = vor.u32 4788187, %v552
      %v554 = vand.u32 2147483647, %v553
      %v556 = vcvt.s32.f32 %v549
      %v557 = vmul.f32 %v556, %v554
      %v558 = vxor.u32 %v557, 2147483648
      %v559 = vsel %vm476, %v558, %v557
      %v560 = vsub.s32 4, %v536
      %v561 = vsel %vm476, %v560, %v536
      %v562 = vsel %vm475, %v347, %v559
      %v563 = vsel %vm475, 0, %v561
      %v564 = vcosq.f32.pop %v562
      %v565 = vsinq.f32.pop %v562
      %vm566 = vweird.f32 %v347
      %v567 = vand.u32 %v563, 3
      %vm568 = vcmp.lt.s32.totalorder %v567, 2
      %vm569 = vcmp.eq.s32.totalorder %v567, 0
      %v570 = vxor.u32 %v565, 2147483648
      %v571 = vsel %vm569, %v564, %v570
      %vm572 = vcmp.eq.s32.totalorder %v567, 2
      %v573 = vxor.u32 %v564, 2147483648
      %v574 = vsel %vm572, %v573, %v565
      %v575 = vsel %vm568, %v571, %v574
      %v576 = vsel %vm566, nan, %v575
      %v577 = vand.u32 2147483647, %v347
      %vm578 = vcmp.le.f32.partialorder %v577, 0.7853982
      %vm579 = vcmp.lt.s32.totalorder %v347, 0
      %v580 = vand.u32 %v347, 2139095040
      %v581 = vshrl.u32 %v580, 23
      %v582 = vsub.s32 %v581, 127
      %v583 = vand.u32 2147483647, %v347
      %v584 = vand.u32 %v583, 8388607
      %v585 = vor.u32 %v584, 8388608
      %v586 = vsub.s32 0, %v585
      %v587 = vadd.s32 %v582, 1
      %vm588 = vcmp.gt.s32.totalorder %v587, 0
      %v589 = vsel %vm588, %v587, 0
      %v590 = vshrl.u32 %v589, 5
      %v591 = vand.u32 %v589, 31
      %v592 = vsub.s32 32, %v591
      %v593 = vshrl.u32 683565275, %v592
      %v594 = vshll.u32 683565275, %v591
      %v595 = vshrl.u32 2475754826, %v592
      %v596 = vor.u32 %v594, %v595
      %v597 = vshll.u32 2475754826, %v591
      %v598 = vshrl.u32 2131351028, %v592
      %v599 = vor.u32 %v597, %v598
      %v600 = vshll.u32 2131351028, %v591
      %v601 = vshrl.u32 2102212464, %v592
      %v602 = vor.u32 %v600, %v601
      %v603 = vshll.u32 2102212464, %v591
      %v604 = vshrl.u32 920167782, %v592
      %v605 = vor.u32 %v603, %v604
      %v606 = vshll.u32 920167782, %v591
      %v607 = vshrl.u32 1326507024, %v592
      %v608 = vor.u32 %v606, %v607
      %vm609 = vcmp.lt.s32.totalorder %v590, 1
      %vm610 = vcmp.lt.s32.totalorder %v590, 2
      %vm611 = vcmp.lt.s32.totalorder %v590, 3
      %vm612 = vcmp.lt.s32.totalorder %v590, 4
      %v613 = vsel %vm609, %v593, %v596
      %v614 = vsel %vm612, %v602, 2102212464
      %v615 = vsel %vm611, %v599, %v614
      %v616 = vsel %vm610, %v613, %v615
      %v617 = vsel %vm609, %v596, %v599
      %v618 = vsel %vm612, %v605, 920167782
      %v619 = vsel %vm611, %v602, %v618
      %v620 = vsel %vm610, %v617, %v619
      %v621 = vsel %vm609, %v599, %v602
      %v622 = vsel %vm612, %v608, 1326507024
      %v623 = vsel %vm611, %v605, %v622
      %v624 = vsel %vm610, %v621, %v623
      %v625 = vshll.u32 %v585, 8
      %v626 = vmul.u32.u64.compose %v625, %v624
      %v627 = vextract.low.u32 %v626
      %v628 = vextract.high.u32 %v626
      %v629 = vmul.u32.u64.compose %v625, %v620
      %v630 = vextract.low.u32 %v629
      %v631 = vextract.high.u32 %v629
      %v632 = vmul.u32 %v625, %v616
      %v633 = vadd.s32 %v628, %v630
      %vm634 = vc.u32 %v628, %v630
      %v635 = vadd.s32 %v631, 1
      %v636 = vsel %vm634, %v635, %v631
      %v637 = vadd.s32 %v632, %v636
      %v638 = vadd.s32 %v637, 536870912
      %v639 = vshrl.u32 %v638, 30
      %v640 = vshll.u32 %v639, 30
      %v641 = vsub.s32 %v637, %v640
      %vm642 = vcmp.lt.s32.totalorder %v641, 0
      %v643 = vsub.s32 0, %v641
      %v644 = vsel %vm642, %v643, %v641
      %v645 = vclz %v644
      %v646 = vsub.s32 %v645, 2
      %vm647 = vcmp.gt.s32.totalorder 0, %v646
      %v648 = vsel %vm647, 0, %v646
      %v649 = vsub.s32 32, %v648
      %v650 = vshll.u32 %v641, %v648
      %v651 = vshrl.u32 %v633, %v649
      %v652 = vor.u32 %v650, %v651
      %v653 = vsub.s32 4294967266, %v648
      %v654 = vadd.s32 %v653, 127
      %v655 = vshll.u32 %v654, 23
      %v656 = vor.u32 4788187, %v655
      %v657 = vand.u32 2147483647, %v656
      %v659 = vcvt.s32.f32 %v652
      %v660 = vmul.f32 %v659, %v657
      %v661 = vxor.u32 %v660, 2147483648
      %v662 = vsel %vm579, %v661, %v660
      %v663 = vsub.s32 4, %v639
      %v664 = vsel %vm579, %v663, %v639
      %v665 = vsel %vm578, %v347, %v662
      %v666 = vsel %vm578, 0, %v664
      %v667 = vcosq.f32.pop %v665
      %v668 = vsinq.f32.pop %v665
      %vm669 = vweird.f32 %v347
      %v670 = vadd.s32 %v666, 3
      %v671 = vand.u32 %v670, 3
      %vm672 = vcmp.lt.s32.totalorder %v671, 2
      %vm673 = vcmp.eq.s32.totalorder %v671, 0
      %v674 = vxor.u32 %v668, 2147483648
      %v675 = vsel %vm673, %v667, %v674
      %vm676 = vcmp.eq.s32.totalorder %v671, 2
      %v677 = vxor.u32 %v667, 2147483648
      %v678 = vsel %vm676, %v677, %v668
      %v679 = vsel %vm672, %v675, %v678
      %v680 = vsel %vm669, nan, %v679
      %v681 = vmul.f32 %v576, 1.5349901
      %v682 = vmul.f32 %v681, %v462
      %683 = vst [vmem:[#allocation2 + $0x2] sm:$0x1] %v682
      %v684 = vmul.f32 %v680, -1.5349901
      %v685 = vmul.f32 %v684, %v462
      %686 = vst [vmem:[#allocation2 + $0x3] sm:$0x1] %v685
      %v687 = vmul.f32 %v470, 3.9633274
      %688 = vst [vmem:[#allocation2 + $0x4] sm:$0x1] %v687
      %v689 = vmul.f32 %v576, 0.6605545
      %v690 = vmul.f32 %v689, %v466
      %691 = vst [vmem:[#allocation2 + $0x5] sm:$0x1] %v690
      %v692 = vmul.f32 %v680, -0.6605545
      %v693 = vmul.f32 %v692, %v466
      %694 = vst [vmem:[#allocation2 + $0x6] sm:$0x1] %v693
      %v695 = vmul.f32 %v347, 2.0
      %v696 = vand.u32 2147483647, %v695
      %vm697 = vcmp.le.f32.partialorder %v696, 0.7853982
      %vm698 = vcmp.lt.s32.totalorder %v695, 0
      %v699 = vand.u32 %v695, 2139095040
      %v700 = vshrl.u32 %v699, 23
      %v701 = vsub.s32 %v700, 127
      %v702 = vand.u32 2147483647, %v695
      %v703 = vand.u32 %v702, 8388607
      %v704 = vor.u32 %v703, 8388608
      %v705 = vsub.s32 0, %v704
      %v706 = vadd.s32 %v701, 1
      %vm707 = vcmp.gt.s32.totalorder %v706, 0
      %v708 = vsel %vm707, %v706, 0
      %v709 = vshrl.u32 %v708, 5
      %v710 = vand.u32 %v708, 31
      %v711 = vsub.s32 32, %v710
      %v712 = vshrl.u32 683565275, %v711
      %v713 = vshll.u32 683565275, %v710
      %v714 = vshrl.u32 2475754826, %v711
      %v715 = vor.u32 %v713, %v714
      %v716 = vshll.u32 2475754826, %v710
      %v717 = vshrl.u32 2131351028, %v711
      %v718 = vor.u32 %v716, %v717
      %v719 = vshll.u32 2131351028, %v710
      %v720 = vshrl.u32 2102212464, %v711
      %v721 = vor.u32 %v719, %v720
      %v722 = vshll.u32 2102212464, %v710
      %v723 = vshrl.u32 920167782, %v711
      %v724 = vor.u32 %v722, %v723
      %v725 = vshll.u32 920167782, %v710
      %v726 = vshrl.u32 1326507024, %v711
      %v727 = vor.u32 %v725, %v726
      %vm728 = vcmp.lt.s32.totalorder %v709, 1
      %vm729 = vcmp.lt.s32.totalorder %v709, 2
      %vm730 = vcmp.lt.s32.totalorder %v709, 3
      %vm731 = vcmp.lt.s32.totalorder %v709, 4
      %v732 = vsel %vm728, %v712, %v715
      %v733 = vsel %vm731, %v721, 2102212464
      %v734 = vsel %vm730, %v718, %v733
      %v735 = vsel %vm729, %v732, %v734
      %v736 = vsel %vm728, %v715, %v718
      %v737 = vsel %vm731, %v724, 920167782
      %v738 = vsel %vm730, %v721, %v737
      %v739 = vsel %vm729, %v736, %v738
      %v740 = vsel %vm728, %v718, %v721
      %v741 = vsel %vm731, %v727, 1326507024
      %v742 = vsel %vm730, %v724, %v741
      %v743 = vsel %vm729, %v740, %v742
      %v744 = vshll.u32 %v704, 8
      %v745 = vmul.u32.u64.compose %v744, %v743
      %v746 = vextract.low.u32 %v745
      %v747 = vextract.high.u32 %v745
      %v748 = vmul.u32.u64.compose %v744, %v739
      %v749 = vextract.low.u32 %v748
      %v750 = vextract.high.u32 %v748
      %v751 = vmul.u32 %v744, %v735
      %v752 = vadd.s32 %v747, %v749
      %vm753 = vc.u32 %v747, %v749
      %v754 = vadd.s32 %v750, 1
      %v755 = vsel %vm753, %v754, %v750
      %v756 = vadd.s32 %v751, %v755
      %v757 = vadd.s32 %v756, 536870912
      %v758 = vshrl.u32 %v757, 30
      %v759 = vshll.u32 %v758, 30
      %v760 = vsub.s32 %v756, %v759
      %vm761 = vcmp.lt.s32.totalorder %v760, 0
      %v762 = vsub.s32 0, %v760
      %v763 = vsel %vm761, %v762, %v760
      %v764 = vclz %v763
      %v765 = vsub.s32 %v764, 2
      %vm766 = vcmp.gt.s32.totalorder 0, %v765
      %v767 = vsel %vm766, 0, %v765
      %v768 = vsub.s32 32, %v767
      %v769 = vshll.u32 %v760, %v767
      %v770 = vshrl.u32 %v752, %v768
      %v771 = vor.u32 %v769, %v770
      %v772 = vsub.s32 4294967266, %v767
      %v773 = vadd.s32 %v772, 127
      %v774 = vshll.u32 %v773, 23
      %v775 = vor.u32 4788187, %v774
      %v776 = vand.u32 2147483647, %v775
      %v778 = vcvt.s32.f32 %v771
      %v779 = vmul.f32 %v778, %v776
      %v780 = vxor.u32 %v779, 2147483648
      %v781 = vsel %vm698, %v780, %v779
      %v782 = vsub.s32 4, %v758
      %v783 = vsel %vm698, %v782, %v758
      %v784 = vsel %vm697, %v695, %v781
      %v785 = vsel %vm697, 0, %v783
      %v786 = vcosq.f32.pop %v784
      %v787 = vsinq.f32.pop %v784
      %vm788 = vweird.f32 %v695
      %v789 = vand.u32 %v785, 3
      %vm790 = vcmp.lt.s32.totalorder %v789, 2
      %vm791 = vcmp.eq.s32.totalorder %v789, 0
      %v792 = vxor.u32 %v787, 2147483648
      %v793 = vsel %vm791, %v786, %v792
      %vm794 = vcmp.eq.s32.totalorder %v789, 2
      %v795 = vxor.u32 %v786, 2147483648
      %v796 = vsel %vm794, %v795, %v787
      %v797 = vsel %vm790, %v793, %v796
      %v798 = vsel %vm788, nan, %v797
      %v799 = vand.u32 2147483647, %v695
      %vm800 = vcmp.le.f32.partialorder %v799, 0.7853982
      %vm801 = vcmp.lt.s32.totalorder %v695, 0
      %v802 = vand.u32 %v695, 2139095040
      %v803 = vshrl.u32 %v802, 23
      %v804 = vsub.s32 %v803, 127
      %v805 = vand.u32 2147483647, %v695
      %v806 = vand.u32 %v805, 8388607
      %v807 = vor.u32 %v806, 8388608
      %v808 = vsub.s32 0, %v807
      %v809 = vadd.s32 %v804, 1
      %vm810 = vcmp.gt.s32.totalorder %v809, 0
      %v811 = vsel %vm810, %v809, 0
      %v812 = vshrl.u32 %v811, 5
      %v813 = vand.u32 %v811, 31
      %v814 = vsub.s32 32, %v813
      %v815 = vshrl.u32 683565275, %v814
      %v816 = vshll.u32 683565275, %v813
      %v817 = vshrl.u32 2475754826, %v814
      %v818 = vor.u32 %v816, %v817
      %v819 = vshll.u32 2475754826, %v813
      %v820 = vshrl.u32 2131351028, %v814
      %v821 = vor.u32 %v819, %v820
      %v822 = vshll.u32 2131351028, %v813
      %v823 = vshrl.u32 2102212464, %v814
      %v824 = vor.u32 %v822, %v823
      %v825 = vshll.u32 2102212464, %v813
      %v826 = vshrl.u32 920167782, %v814
      %v827 = vor.u32 %v825, %v826
      %v828 = vshll.u32 920167782, %v813
      %v829 = vshrl.u32 1326507024, %v814
      %v830 = vor.u32 %v828, %v829
      %vm831 = vcmp.lt.s32.totalorder %v812, 1
      %vm832 = vcmp.lt.s32.totalorder %v812, 2
      %vm833 = vcmp.lt.s32.totalorder %v812, 3
      %vm834 = vcmp.lt.s32.totalorder %v812, 4
      %v835 = vsel %vm831, %v815, %v818
      %v836 = vsel %vm834, %v824, 2102212464
      %v837 = vsel %vm833, %v821, %v836
      %v838 = vsel %vm832, %v835, %v837
      %v839 = vsel %vm831, %v818, %v821
      %v840 = vsel %vm834, %v827, 920167782
      %v841 = vsel %vm833, %v824, %v840
      %v842 = vsel %vm832, %v839, %v841
      %v843 = vsel %vm831, %v821, %v824
      %v844 = vsel %vm834, %v830, 1326507024
      %v845 = vsel %vm833, %v827, %v844
      %v846 = vsel %vm832, %v843, %v845
      %v847 = vshll.u32 %v807, 8
      %v848 = vmul.u32.u64.compose %v847, %v846
      %v849 = vextract.low.u32 %v848
      %v850 = vextract.high.u32 %v848
      %v851 = vmul.u32.u64.compose %v847, %v842
      %v852 = vextract.low.u32 %v851
      %v853 = vextract.high.u32 %v851
      %v854 = vmul.u32 %v847, %v838
      %v855 = vadd.s32 %v850, %v852
      %vm856 = vc.u32 %v850, %v852
      %v857 = vadd.s32 %v853, 1
      %v858 = vsel %vm856, %v857, %v853
      %v859 = vadd.s32 %v854, %v858
      %v860 = vadd.s32 %v859, 536870912
      %v861 = vshrl.u32 %v860, 30
      %v862 = vshll.u32 %v861, 30
      %v863 = vsub.s32 %v859, %v862
      %vm864 = vcmp.lt.s32.totalorder %v863, 0
      %v865 = vsub.s32 0, %v863
      %v866 = vsel %vm864, %v865, %v863
      %v867 = vclz %v866
      %v868 = vsub.s32 %v867, 2
      %vm869 = vcmp.gt.s32.totalorder 0, %v868
      %v870 = vsel %vm869, 0, %v868
      %v871 = vsub.s32 32, %v870
      %v872 = vshll.u32 %v863, %v870
      %v873 = vshrl.u32 %v855, %v871
      %v874 = vor.u32 %v872, %v873
      %v875 = vsub.s32 4294967266, %v870
      %v876 = vadd.s32 %v875, 127
      %v877 = vshll.u32 %v876, 23
      %v878 = vor.u32 4788187, %v877
      %v879 = vand.u32 2147483647, %v878
      %v881 = vcvt.s32.f32 %v874
      %v882 = vmul.f32 %v881, %v879
      %v883 = vxor.u32 %v882, 2147483648
      %v884 = vsel %vm801, %v883, %v882
      %v885 = vsub.s32 4, %v861
      %v886 = vsel %vm801, %v885, %v861
      %v887 = vsel %vm800, %v695, %v884
      %v888 = vsel %vm800, 0, %v886
      %v889 = vcosq.f32.pop %v887
      %v890 = vsinq.f32.pop %v887
      %vm891 = vweird.f32 %v695
      %v892 = vadd.s32 %v888, 3
      %v893 = vand.u32 %v892, 3
      %vm894 = vcmp.lt.s32.totalorder %v893, 2
      %vm895 = vcmp.eq.s32.totalorder %v893, 0
      %v896 = vxor.u32 %v890, 2147483648
      %v897 = vsel %vm895, %v889, %v896
      %vm898 = vcmp.eq.s32.totalorder %v893, 2
      %v899 = vxor.u32 %v889, 2147483648
      %v900 = vsel %vm898, %v899, %v890
      %v901 = vsel %vm894, %v897, %v900
      %v902 = vsel %vm891, nan, %v901
      %v903 = vmul.f32 %v798, 0.16513863
      %v904 = vmul.f32 %v903, %v464
      %905 = vst [vmem:[#allocation2 + $0x7] sm:$0x1] %v904
      %v906 = vmul.f32 %v902, -0.16513863
      %v907 = vmul.f32 %v906, %v464
      %908 = vst [vmem:[#allocation2 + $0x8] sm:$0x1] %v907
      %v909 = vld [vmem:[#allocation2] sm:$0xff]
      %v910 = vld [vmem:[#allocation2 + $0x8] sm:$0x1]
      %v912 = vlaneseq
      %v913 = vshrl.u32 %v912, 7
      %v914 = vsub.s32 0, %v913
      %v915 = vrot.slane %v348, %v914
      %v917 = vmul.f32 %v909, %v915
      %v918 = vmul.f32 %v910, %v915
      %v919 = vpack.c.bf16 %v918, %v917
      %v920 = vld [vmem:[%s330] sm:$0xff]
      %v921 = vld [vmem:[%s330 + $0x8] sm:$0xff]
      %v922 = vld [vmem:[%s330 + $0x10] sm:$0xff]
      %v923 = vld [vmem:[%s330 + $0x18] sm:$0xff]
      %v924 = vld [vmem:[%s330 + $0x20] sm:$0xff]
      %v925 = vld [vmem:[%s330 + $0x28] sm:$0xff]
      %v926 = vld [vmem:[%s330 + $0x30] sm:$0xff]
      %v927 = vld [vmem:[%s330 + $0x38] sm:$0xff]
      %v928 = vld [vmem:[%s330 + $0x40] sm:$0xff]
      %v929 = vld [vmem:[%s330 + $0x48] sm:$0xff]
      %v930 = vld [vmem:[%s330 + $0x50] sm:$0xff]
      %v931 = vld [vmem:[%s330 + $0x58] sm:$0xff]
      %v932 = vld [vmem:[%s330 + $0x60] sm:$0xff]
      %v933 = vld [vmem:[%s330 + $0x68] sm:$0xff]
      %v934 = vld [vmem:[%s330 + $0x70] sm:$0xff]
      %v935 = vld [vmem:[%s330 + $0x78] sm:$0xff]
      %v936 = vpack.c.bf16 %v921, %v920
      %v937 = vpack.c.bf16 %v923, %v922
      %v938 = vpack.c.bf16 %v925, %v924
      %v939 = vpack.c.bf16 %v927, %v926
      %v940 = vpack.c.bf16 %v929, %v928
      %v941 = vpack.c.bf16 %v931, %v930
      %v942 = vpack.c.bf16 %v933, %v932
      %v943 = vpack.c.bf16 %v935, %v934
      %v944 = vld [vmem:[#allocation3] sm:$0xff]
      %v945 = vld [vmem:[#allocation3 + $0x8] sm:$0x1]
      %946 = vmatprep.subr.bf16.mxu0 0
      %947 = vmatpush1.bf16.msra.mxu0 %v936
      %948 = vmatprep.subr.bf16.mxu0 0
      %949 = vmatpush1.bf16.msra.mxu0 %v937
      %950 = vmatprep.subr.bf16.mxu0 0
      %951 = vmatpush1.bf16.msra.mxu0 %v938
      %952 = vmatprep.subr.bf16.mxu0 0
      %953 = vmatpush1.bf16.msra.mxu0 %v939
      %954 = vmatprep.subr.bf16.mxu0 0
      %955 = vmatpush1.bf16.msra.mxu0 %v940
      %956 = vmatprep.subr.bf16.mxu0 0
      %957 = vmatpush1.bf16.msra.mxu0 %v941
      %958 = vmatprep.subr.bf16.mxu0 0
      %959 = vmatpush1.bf16.msra.mxu0 %v942
      %960 = vmatprep.subr.bf16.mxu0 0
      %961 = vmatpush1.bf16.msra.mxu0 %v943
      %962 = vmatprep.subr.bf16.mxu0 0
      %963 = vmatpush1.bf16.msra.mxu0 0
      %964 = vmatprep.subr.bf16.mxu0 0
      %965 = vmatpush1.bf16.msra.mxu0 0
      %966 = vmatprep.subr.bf16.mxu0 0
      %967 = vmatpush1.bf16.msra.mxu0 0
      %968 = vmatprep.subr.bf16.mxu0 0
      %969 = vmatpush1.bf16.msra.mxu0 0
      %970 = vmatprep.subr.bf16.mxu0 0
      %971 = vmatpush1.bf16.msra.mxu0 0
      %972 = vmatprep.subr.bf16.mxu0 0
      %973 = vmatpush1.bf16.msra.mxu0 0
      %974 = vmatprep.subr.bf16.mxu0 0
      %975 = vmatpush1.bf16.msra.mxu0 0
      %976 = vmatprep.subr.bf16.mxu0 0
      %977 = vmatpush1.bf16.msra.mxu0 0
      %978 = vmatprep.mubr.bf16.mxu0 0
      %979 = vmatmul.mubr.bf16.gmra.mrb[0].mxu0 %v919
      %v980 = vpop.f32.mrb[0].mxu0
      %v981 = vadd.f32 0.0, %v980
      %v982 = vpop.f32.mrb[0].mxu0
      %v983 = vpop.f32.mrb[0].mxu0
      %v984 = vadd.f32 0.0, %v983
      %v985 = vpop.f32.mrb[0].mxu0
      %986 = vdwg.mxu0
      %v987 = vadd.f32 %v944, %v981
      %v988 = vadd.f32 %v945, %v984
      %vm989 = vcmask 64512
      %990 = vst.msk [vmem:[#allocation3] sm:$0xff] %vm989, %v987
      %vm991 = vcmask 57344
      %992 = vst.msk [vmem:[#allocation3 + $0x8] sm:$0x1] %vm991, %v988
      %p993 = scmp.eq.s32.totalorder %s21, 3
      // Predicated region
      $region45: #{tpu_custom_call.1} parent=39 // pred_check
        %p994 = pneg %p993
      $region46: #{tpu_custom_call.1} parent=39 // pred_check_branch
        %996 = sbr.rel (%p994) target = $region48
      $region47: #{tpu_custom_call.1} parent=39 // pred_region
        %v997 = vld [vmem:[#allocation3] sm:$0xff]
        %v998 = vld [vmem:[#allocation3 + $0x8] sm:$0x1]
        %v999 = vlaneseq
        %v1000 = vshrl.u32 %v999, 7
        %v1001 = vadd.s32 %v1000, 8
        %vm1002 = vcmp.ge.s32.totalorder %v1000, 0
        %vm1003 = vcmp.ge.s32.totalorder %v1001, 0
        %vm1004 = vcmp.lt.s32.totalorder %v1000, 1
        %vm1005 = vcmp.lt.s32.totalorder %v1001, 1
        %vm1006 = vmand %vm1002, %vm1004
        %vm1007 = vmand %vm1003, %vm1005
        %v1008 = vsel %vm1006, 1, 0
        %v1009 = vsel %vm1007, 1, 0
        %vm1010 = vcmp.eq.s32.totalorder %v1008, 1
        %vm1011 = vcmp.eq.s32.totalorder %v1009, 1
        %v1012 = vsel %vm1010, %v997, 0.0
        %v1013 = vsel %vm1011, %v998, 0.0
        %v1014 = vld [vmem:[%s4] sm:$0xff]
        %vm1015 = vcmp.ge.s32.totalorder %v1000, 1
        %vm1016 = vcmp.ge.s32.totalorder %v1001, 1
        %vm1017 = vcmp.lt.s32.totalorder %v1000, 4
        %vm1018 = vcmp.lt.s32.totalorder %v1001, 4
        %vm1019 = vmand %vm1015, %vm1017
        %vm1020 = vmand %vm1016, %vm1018
        %v1021 = vsel %vm1019, 1, 0
        %v1022 = vsel %vm1020, 1, 0
        %vm1023 = vcmp.eq.s32.totalorder %v1021, 1
        %vm1024 = vcmp.eq.s32.totalorder %v1022, 1
        %v1025 = vsel %vm1023, %v997, 0.0
        %v1026 = vsel %vm1024, %v998, 0.0
        %s1027 = scalar_lea.vmem %s4, 8
        %v1028 = vld [vmem:[%s1027] sm:$0xff]
        %v1030 = vsel %vm989, %v1025, 0
        %v1033 = vsel %vm989, %v1026, 0
        %1035 = vmatprep.subr.mxu0 0.0
        %1036 = vmatpush1.msra.mxu0 %v1028
        %1037 = vmatprep.subr.mxu0 0.0
        %1038 = vmatpush1.msra.mxu0 0.0
        %1039 = vmatprep.subr.mxu0 0.0
        %1040 = vmatpush1.msra.mxu0 0.0
        %1041 = vmatprep.subr.mxu0 0.0
        %1042 = vmatpush1.msra.mxu0 0.0
        %1043 = vmatprep.subr.mxu0 0.0
        %1044 = vmatpush1.msra.mxu0 0.0
        %1045 = vmatprep.subr.mxu0 0.0
        %1046 = vmatpush1.msra.mxu0 0.0
        %1047 = vmatprep.subr.mxu0 0.0
        %1048 = vmatpush1.msra.mxu0 0.0
        %1049 = vmatprep.subr.mxu0 0.0
        %1050 = vmatpush1.msra.mxu0 0.0
        %1051 = vmatprep.subr.mxu0 0.0
        %1052 = vmatpush1.msra.mxu0 0.0
        %1053 = vmatprep.subr.mxu0 0.0
        %1054 = vmatpush1.msra.mxu0 0.0
        %1055 = vmatprep.subr.mxu0 0.0
        %1056 = vmatpush1.msra.mxu0 0.0
        %1057 = vmatprep.subr.mxu0 0.0
        %1058 = vmatpush1.msra.mxu0 0.0
        %1059 = vmatprep.subr.mxu0 0.0
        %1060 = vmatpush1.msra.mxu0 0.0
        %1061 = vmatprep.subr.mxu0 0.0
        %1062 = vmatpush1.msra.mxu0 0.0
        %1063 = vmatprep.subr.mxu0 0.0
        %1064 = vmatpush1.msra.mxu0 0.0
        %1065 = vmatprep.subr.mxu0 0.0
        %1066 = vmatpush1.msra.mxu0 0.0
        %1067 = vmatprep.subr.mxu0 0.0
        %1068 = vmatpush1.msra.mxu0 0.0
        %1069 = vmatprep.subr.mxu0 0.0
        %1070 = vmatpush1.msra.mxu0 0.0
        %1071 = vmatprep.subr.mxu0 0.0
        %1072 = vmatpush1.msra.mxu0 0.0
        %1073 = vmatprep.subr.mxu0 0.0
        %1074 = vmatpush1.msra.mxu0 0.0
        %1075 = vmatprep.subr.mxu0 0.0
        %1076 = vmatpush1.msra.mxu0 0.0
        %1077 = vmatprep.subr.mxu0 0.0
        %1078 = vmatpush1.msra.mxu0 0.0
        %1079 = vmatprep.subr.mxu0 0.0
        %1080 = vmatpush1.msra.mxu0 0.0
        %1081 = vmatprep.subr.mxu0 0.0
        %1082 = vmatpush1.msra.mxu0 0.0
        %1083 = vmatprep.subr.mxu0 0.0
        %1084 = vmatpush1.msra.mxu0 0.0
        %1085 = vmatprep.subr.mxu0 0.0
        %1086 = vmatpush1.msra.mxu0 0.0
        %1087 = vmatprep.subr.mxu0 0.0
        %1088 = vmatpush1.msra.mxu0 0.0
        %1089 = vmatprep.subr.mxu0 0.0
        %1090 = vmatpush1.msra.mxu0 0.0
        %1091 = vmatprep.subr.mxu0 0.0
        %1092 = vmatpush1.msra.mxu0 0.0
        %1093 = vmatprep.subr.mxu0 0.0
        %1094 = vmatpush1.msra.mxu0 0.0
        %1095 = vmatprep.subr.mxu0 0.0
        %1096 = vmatpush1.msra.mxu0 0.0
        %1097 = vmatprep.subr.mxu0 0.0
        %1098 = vmatpush1.msra.mxu0 0.0
        %1099 = vmatprep.mubr.f32.mxu0 0.0
        %1100 = vmatmul.mubr.f32.gmra.mrb[0].mxu0 %v1030
        %v1101 = vpop.f32.mrb[0].mxu0
        %v1102 = vadd.f32 0.0, %v1101
        %v1103 = vpop.f32.mrb[0].mxu0
        %1104 = vmatprep.mubr.f32.mxu0 0.0
        %1105 = vmatmul.mubr.f32.gmra.mrb[0].mxu0 %v1033
        %v1106 = vpop.f32.mrb[0].mxu0
        %v1107 = vadd.f32 0.0, %v1106
        %v1108 = vpop.f32.mrb[0].mxu0
        %1109 = vdwg.mxu0
        %v1111 = vsel %vm989, %v1012, 0
        %v1114 = vsel %vm989, %v1013, 0
        %1116 = vmatprep.subr.mxu0 0.0
        %1117 = vmatpush1.msra.mxu0 %v1014
        %1118 = vmatprep.subr.mxu0 0.0
        %1119 = vmatpush1.msra.mxu0 0.0
        %1120 = vmatprep.subr.mxu0 0.0
        %1121 = vmatpush1.msra.mxu0 0.0
        %1122 = vmatprep.subr.mxu0 0.0
        %1123 = vmatpush1.msra.mxu0 0.0
        %1124 = vmatprep.subr.mxu0 0.0
        %1125 = vmatpush1.msra.mxu0 0.0
        %1126 = vmatprep.subr.mxu0 0.0
        %1127 = vmatpush1.msra.mxu0 0.0
        %1128 = vmatprep.subr.mxu0 0.0
        %1129 = vmatpush1.msra.mxu0 0.0
        %1130 = vmatprep.subr.mxu0 0.0
        %1131 = vmatpush1.msra.mxu0 0.0
        %1132 = vmatprep.subr.mxu0 0.0
        %1133 = vmatpush1.msra.mxu0 0.0
        %1134 = vmatprep.subr.mxu0 0.0
        %1135 = vmatpush1.msra.mxu0 0.0
        %1136 = vmatprep.subr.mxu0 0.0
        %1137 = vmatpush1.msra.mxu0 0.0
        %1138 = vmatprep.subr.mxu0 0.0
        %1139 = vmatpush1.msra.mxu0 0.0
        %1140 = vmatprep.subr.mxu0 0.0
        %1141 = vmatpush1.msra.mxu0 0.0
        %1142 = vmatprep.subr.mxu0 0.0
        %1143 = vmatpush1.msra.mxu0 0.0
        %1144 = vmatprep.subr.mxu0 0.0
        %1145 = vmatpush1.msra.mxu0 0.0
        %1146 = vmatprep.subr.mxu0 0.0
        %1147 = vmatpush1.msra.mxu0 0.0
        %1148 = vmatprep.subr.mxu0 0.0
        %1149 = vmatpush1.msra.mxu0 0.0
        %1150 = vmatprep.subr.mxu0 0.0
        %1151 = vmatpush1.msra.mxu0 0.0
        %1152 = vmatprep.subr.mxu0 0.0
        %1153 = vmatpush1.msra.mxu0 0.0
        %1154 = vmatprep.subr.mxu0 0.0
        %1155 = vmatpush1.msra.mxu0 0.0
        %1156 = vmatprep.subr.mxu0 0.0
        %1157 = vmatpush1.msra.mxu0 0.0
        %1158 = vmatprep.subr.mxu0 0.0
        %1159 = vmatpush1.msra.mxu0 0.0
        %1160 = vmatprep.subr.mxu0 0.0
        %1161 = vmatpush1.msra.mxu0 0.0
        %1162 = vmatprep.subr.mxu0 0.0
        %1163 = vmatpush1.msra.mxu0 0.0
        %1164 = vmatprep.subr.mxu0 0.0
        %1165 = vmatpush1.msra.mxu0 0.0
        %1166 = vmatprep.subr.mxu0 0.0
        %1167 = vmatpush1.msra.mxu0 0.0
        %1168 = vmatprep.subr.mxu0 0.0
        %1169 = vmatpush1.msra.mxu0 0.0
        %1170 = vmatprep.subr.mxu0 0.0
        %1171 = vmatpush1.msra.mxu0 0.0
        %1172 = vmatprep.subr.mxu0 0.0
        %1173 = vmatpush1.msra.mxu0 0.0
        %1174 = vmatprep.subr.mxu0 0.0
        %1175 = vmatpush1.msra.mxu0 0.0
        %1176 = vmatprep.subr.mxu0 0.0
        %1177 = vmatpush1.msra.mxu0 0.0
        %1178 = vmatprep.subr.mxu0 0.0
        %1179 = vmatpush1.msra.mxu0 0.0
        %1180 = vmatprep.mubr.f32.mxu0 0.0
        %1181 = vmatmul.mubr.f32.gmra.mrb[0].mxu0 %v1111
        %v1182 = vpop.f32.mrb[0].mxu0
        %v1183 = vadd.f32 %v1102, %v1182
        %v1184 = vpop.f32.mrb[0].mxu0
        %1185 = vmatprep.mubr.f32.mxu0 0.0
        %1186 = vmatmul.mubr.f32.gmra.mrb[0].mxu0 %v1114
        %v1187 = vpop.f32.mrb[0].mxu0
        %v1188 = vadd.f32 %v1107, %v1187
        %v1189 = vpop.f32.mrb[0].mxu0
        %1190 = vdwg.mxu0
        %vm1191 = vcmp.ge.s32.totalorder %v1000, 4
        %vm1192 = vcmp.ge.s32.totalorder %v1001, 4
        %vm1193 = vcmp.lt.s32.totalorder %v1000, 9
        %vm1194 = vcmp.lt.s32.totalorder %v1001, 9
        %vm1195 = vmand %vm1191, %vm1193
        %vm1196 = vmand %vm1192, %vm1194
        %v1197 = vsel %vm1195, 1, 0
        %v1198 = vsel %vm1196, 1, 0
        %vm1199 = vcmp.eq.s32.totalorder %v1197, 1
        %vm1200 = vcmp.eq.s32.totalorder %v1198, 1
        %v1201 = vsel %vm1199, %v997, 0.0
        %v1202 = vsel %vm1200, %v998, 0.0
        %s1203 = scalar_lea.vmem %s4, 16
        %v1204 = vld [vmem:[%s1203] sm:$0xff]
        %v1206 = vsel %vm989, %v1201, 0
        %v1209 = vsel %vm989, %v1202, 0
        %1211 = vmatprep.subr.mxu0 0.0
        %1212 = vmatpush1.msra.mxu0 %v1204
        %1213 = vmatprep.subr.mxu0 0.0
        %1214 = vmatpush1.msra.mxu0 0.0
        %1215 = vmatprep.subr.mxu0 0.0
        %1216 = vmatpush1.msra.mxu0 0.0
        %1217 = vmatprep.subr.mxu0 0.0
        %1218 = vmatpush1.msra.mxu0 0.0
        %1219 = vmatprep.subr.mxu0 0.0
        %1220 = vmatpush1.msra.mxu0 0.0
        %1221 = vmatprep.subr.mxu0 0.0
        %1222 = vmatpush1.msra.mxu0 0.0
        %1223 = vmatprep.subr.mxu0 0.0
        %1224 = vmatpush1.msra.mxu0 0.0
        %1225 = vmatprep.subr.mxu0 0.0
        %1226 = vmatpush1.msra.mxu0 0.0
        %1227 = vmatprep.subr.mxu0 0.0
        %1228 = vmatpush1.msra.mxu0 0.0
        %1229 = vmatprep.subr.mxu0 0.0
        %1230 = vmatpush1.msra.mxu0 0.0
        %1231 = vmatprep.subr.mxu0 0.0
        %1232 = vmatpush1.msra.mxu0 0.0
        %1233 = vmatprep.subr.mxu0 0.0
        %1234 = vmatpush1.msra.mxu0 0.0
        %1235 = vmatprep.subr.mxu0 0.0
        %1236 = vmatpush1.msra.mxu0 0.0
        %1237 = vmatprep.subr.mxu0 0.0
        %1238 = vmatpush1.msra.mxu0 0.0
        %1239 = vmatprep.subr.mxu0 0.0
        %1240 = vmatpush1.msra.mxu0 0.0
        %1241 = vmatprep.subr.mxu0 0.0
        %1242 = vmatpush1.msra.mxu0 0.0
        %1243 = vmatprep.subr.mxu0 0.0
        %1244 = vmatpush1.msra.mxu0 0.0
        %1245 = vmatprep.subr.mxu0 0.0
        %1246 = vmatpush1.msra.mxu0 0.0
        %1247 = vmatprep.subr.mxu0 0.0
        %1248 = vmatpush1.msra.mxu0 0.0
        %1249 = vmatprep.subr.mxu0 0.0
        %1250 = vmatpush1.msra.mxu0 0.0
        %1251 = vmatprep.subr.mxu0 0.0
        %1252 = vmatpush1.msra.mxu0 0.0
        %1253 = vmatprep.subr.mxu0 0.0
        %1254 = vmatpush1.msra.mxu0 0.0
        %1255 = vmatprep.subr.mxu0 0.0
        %1256 = vmatpush1.msra.mxu0 0.0
        %1257 = vmatprep.subr.mxu0 0.0
        %1258 = vmatpush1.msra.mxu0 0.0
        %1259 = vmatprep.subr.mxu0 0.0
        %1260 = vmatpush1.msra.mxu0 0.0
        %1261 = vmatprep.subr.mxu0 0.0
        %1262 = vmatpush1.msra.mxu0 0.0
        %1263 = vmatprep.subr.mxu0 0.0
        %1264 = vmatpush1.msra.mxu0 0.0
        %1265 = vmatprep.subr.mxu0 0.0
        %1266 = vmatpush1.msra.mxu0 0.0
        %1267 = vmatprep.subr.mxu0 0.0
        %1268 = vmatpush1.msra.mxu0 0.0
        %1269 = vmatprep.subr.mxu0 0.0
        %1270 = vmatpush1.msra.mxu0 0.0
        %1271 = vmatprep.subr.mxu0 0.0
        %1272 = vmatpush1.msra.mxu0 0.0
        %1273 = vmatprep.subr.mxu0 0.0
        %1274 = vmatpush1.msra.mxu0 0.0
        %1275 = vmatprep.mubr.f32.mxu0 0.0
        %1276 = vmatmul.mubr.f32.gmra.mrb[0].mxu0 %v1206
        %v1277 = vpop.f32.mrb[0].mxu0
        %v1278 = vadd.f32 0.0, %v1277
        %v1279 = vpop.f32.mrb[0].mxu0
        %1280 = vmatprep.mubr.f32.mxu0 0.0
        %1281 = vmatmul.mubr.f32.gmra.mrb[0].mxu0 %v1209
        %v1282 = vpop.f32.mrb[0].mxu0
        %v1283 = vadd.f32 0.0, %v1282
        %v1284 = vpop.f32.mrb[0].mxu0
        %1285 = vdwg.mxu0
        %v1286 = vadd.f32 %v1183, %v1278
        %v1287 = vadd.f32 %v1188, %v1283
        %vm1288 = vcmp.ge.f32.partialorder %v1286, 0.0
        %vm1289 = vcmp.ge.f32.partialorder %v1287, 0.0
        %v1290 = vmul.f32 %v1286, 0.01
        %v1291 = vmul.f32 %v1287, 0.01
        %v1292 = vsel %vm1288, %v1286, %v1290
        %v1293 = vsel %vm1289, %v1287, %v1291
        %vm1294 = vcmask 261120
        %1295 = vst.msk [vmem:[%s336] sm:$0xff] %vm1294, %v1292
        %vm1296 = vcmask 253952
        %1297 = vst.msk [vmem:[%s336 + $0x8] sm:$0x1] %vm1296, %v1293
      $region48: #{tpu_custom_call.1} parent=39 // pred_fallthru
        _
      %p1298 = scmp.lt.s32.totalorder %s20, 1
      %s1299 = scalar_select %p1298, %s20, 1
      %s1300 = smul.addr %s1299, 2
      %s1301 = smul.addr %s1300, 8
      %s1302 = scalar_lea.vmem %s5, %s1301
      // Predicated region
      $region49: #{tpu_custom_call.1} parent=39 // pred_check
        %p1303 = pneg %p179
      $region50: #{tpu_custom_call.1} parent=39 // pred_check_branch
        %1305 = sbr.rel (%p1303) target = $region52
      $region51: #{tpu_custom_call.1} parent=39 // pred_region
        _
      $region52: #{tpu_custom_call.1} parent=39 // pred_fallthru
        _
    $region40: #{tpu_custom_call.1} parent=5 // pred_fallthru
      _
    %p1306 = scmp.le.s32.totalorder 2, %s11
    // Predicated region
    $region53: #{tpu_custom_call.1} parent=5 // pred_check
      %p1307 = pneg %p1306
    $region54: #{tpu_custom_call.1} parent=5 // pred_check_branch
      %1309 = sbr.rel (%p1307) target = $region56
    $region55: #{tpu_custom_call.1} parent=5 // pred_region
      %s1310 = ssub.s32 %s11, 2
      // Predicated region
      $region57: #{tpu_custom_call.1} parent=55 // pred_check
        %p1311 = pneg %p185
      $region58: #{tpu_custom_call.1} parent=55 // pred_check_branch
        %1313 = sbr.rel (%p1311) target = $region60
      $region59: #{tpu_custom_call.1} parent=55 // pred_region
        %p1314 = scmp.lt.s32.totalorder %s22, 1
        %s1315 = scalar_select %p1314, %s22, 1
        %s1316 = smul.addr %s1315, 2
        %s1317 = smul.addr %s1316, 8
        %s1318 = scalar_lea.vmem %s5, %s1317
      $region60: #{tpu_custom_call.1} parent=55 // pred_fallthru
        _
    $region56: #{tpu_custom_call.1} parent=5 // pred_fallthru
      _
  $region6: #{tpu_custom_call.1} parent=0 // loop_footer
    %s15 = sadd.s32 1, %s11
  $region7: #{tpu_custom_call.1} parent=0 // loop_footer_branch
    %10 = sbr.rel target = $region3
  $region8: #{tpu_custom_call.1} parent=0 // loop_exit
    _

</llo_original>
